<compile_context>
chip_gen: v5e
topology: v5e:2x2
jax: 0.10.0
libtpu: 0.0.40
codegen_flags: <defaults>
</compile_context>

<pallas_src>
import jax
import jax.numpy as jnp
from jax import lax
from jax.scipy.linalg import cho_solve
from jax.experimental import pallas as pl
from jax.experimental.pallas import tpu as pltpu

_PI = 3.14159265358979323846


# ----------------------------------------------------------------------------
# In-kernel order-1 arc-cosine kernel (batch on lanes, fully divide-free).
# ----------------------------------------------------------------------------
def _acos_poly(c):
    """Abramowitz & Stegun 4.4.45 acos approximation (|err| < 7e-5 rad).
    Only sqrt/mul/add/select -> VPU + one EUP sqrt per element."""
    a = jnp.abs(c)
    p = 1.5707288 + a * (-0.2121144 + a * (0.0742610 + a * (-0.0187293)))
    r = jnp.sqrt(jnp.maximum(1.0 - a, 0.0)) * p
    return jnp.where(c >= 0.0, r, _PI - r)


def _arccos_khat(z_hat, ft, sq, xn_inv):
    """Scaled arc-cosine kernel K_hat(z, x) = (pi / ||z||) * K(z, x).

    z_hat : (M, D) unit rows z/||z||      ft     : (D, N)  inputs, batch on lanes
    sq    : (1, N) ||x||^2                xn_inv : (1, N)  1/||x||
    Returns (M, N).  The missing ||z||/pi factor is folded into the RHS
    matrices host-side, so no per-element divide / denom multiply is needed.
    """
    d = jnp.dot(z_hat, ft, preferred_element_type=jnp.float32)   # (M, N) = ||x|| cos(th)
    c = jnp.clip(d * xn_inv, -1.0, 1.0)
    theta = _acos_poly(c)
    s = jnp.sqrt(jnp.maximum(sq - d * d, 0.0))                   # ||x|| sin(th)
    return s + (_PI - theta) * d                                 # ||x|| * J1(th)


# ----------------------------------------------------------------------------
# Fused DGP forward kernel factory.
#
# plan: tuple of steps in execution order:
#   "spk_add" : f += A_hat_s^T @ K_hat(z_s, spk)
#   "mean"    : f  = A_hat^T   @ K_hat(z,   f)
#   "final"   : mc = [C_hat ; A_hat^T] @ K_hat  (C first -> kc tile-aligned)
#               mean = mc[M:], var = ||x||^2 + sum_m kc_m * K_hat_m
# Each step consumes 2 param refs: z_hat (M, D), rhs^T ((H or M+O), M).
# ----------------------------------------------------------------------------
def _make_fused_dgp_kernel(plan, out_dim):
    n_param = 2 * len(plan)

    def kernel(*refs):
        ft_ref, spkt_ref = refs[0], refs[1]
        params = refs[2:2 + n_param]
        out_ref = refs[2 + n_param]                       # (2*O, TN)

        f = ft_ref[...]                                   # (D0, TN) f32
        spk = spkt_ref[...]                               # (Ds, TN)
        # speaker-code norms: computed once, reused by every speaker GP
        spk_sq = jnp.sum(spk * spk, axis=0, keepdims=True)          # (1, TN)
        spk_inv = lax.rsqrt(jnp.maximum(spk_sq, 1e-24))             # (1, TN)

        p = 0
        for kind in plan:                                 # unrolled
            z_hat = params[p][...]
            rhs = params[p + 1][...]
            p += 2
            if kind == "spk_add":
                khat = _arccos_khat(z_hat, spk, spk_sq, spk_inv)    # (Ms, TN)
                f = f + jnp.dot(rhs, khat, preferred_element_type=jnp.float32)
            else:
                sq = jnp.sum(f * f, axis=0, keepdims=True)          # (1, TN) = k(x,x)
                xinv = lax.rsqrt(jnp.maximum(sq, 1e-24))
                khat = _arccos_khat(z_hat, f, sq, xinv)             # (M, TN)
                if kind == "mean":
                    f = jnp.dot(rhs, khat, preferred_element_type=jnp.float32)
                else:  # "final": rhs = [C_hat (M,M) ; A_hat^T (O,M)], single MXU dot
                    m = z_hat.shape[0]
                    mc = jnp.dot(rhs, khat, preferred_element_type=jnp.float32)
                    kc = mc[:m, :]                                  # (M, TN), sublane-aligned
                    mean = mc[m:, :]                                # (O, TN)
                    var = sq + jnp.sum(kc * khat, axis=0, keepdims=True)
                    var = jnp.maximum(var, 1e-8)
                    out_ref[0:out_dim, :] = mean
                    out_ref[out_dim:2 * out_dim, :] = jnp.broadcast_to(var, mean.shape)

    return kernel


# ----------------------------------------------------------------------------
# Per-layer parameter precompute (plain JAX, parameter-only, exact arccos).
#   A = Kzz^{-1} q_mu                (Cholesky solve, no explicit inverse)
#   C = q_s * Kzz^{-2} - Kzz^{-1}    (only for the last layer)
# The ||z||/pi factor of K_xz is folded into A/C here so the kernel never
# multiplies by it:   A_hat = A * (||z||/pi),   C_hat = D C D, D = diag(||z||/pi).
# ----------------------------------------------------------------------------
def _make_svgp_layer(key, in_dim, out_dim, num_inducing, q_s_value,
                     need_var, jitter=1e-4):
    kz, km = jax.random.split(key)
    z = 0.5 * jax.random.normal(kz, (num_inducing, in_dim), jnp.float32)
    q_mu = 0.1 * jax.random.normal(km, (num_inducing, out_dim), jnp.float32)

    zn = jnp.sqrt(jnp.sum(z * z, axis=-1, keepdims=True))           # (M, 1)
    dot = z @ z.T
    denom = jnp.maximum(zn * zn.T, 1e-12)
    c = jnp.clip(dot / denom, -1.0, 1.0)
    theta = jnp.arccos(c)
    j1 = jnp.sin(theta) + (jnp.pi - theta) * c
    kzz = (1.0 / jnp.pi) * (zn * zn.T) * j1
    kzz = kzz + jitter * jnp.eye(num_inducing, dtype=jnp.float32)

    chol = jnp.linalg.cholesky(kzz)
    a = cho_solve((chol, True), q_mu)                                # (M, O)

    scale = zn / jnp.pi                                              # (M, 1)
    z_hat = z / jnp.maximum(zn, 1e-12)                               # unit rows
    if need_var:
        eye = jnp.eye(num_inducing, dtype=jnp.float32)
        kzz_inv = cho_solve((chol, True), eye)
        c_mat = q_s_value * (kzz_inv @ kzz_inv) - kzz_inv            # (M, M)
        c_hat = scale * c_mat * scale.T                              # D C D
        rhs_t = jnp.concatenate([c_hat, (a * scale).T], axis=0)      # (M+O, M), C first
    else:
        rhs_t = (a * scale).T                                        # (O, M)
    return {"z_hat": z_hat, "rhs_t": rhs_t}


# ----------------------------------------------------------------------------
# DGP wrapper.
# ----------------------------------------------------------------------------
class DGPPallas:
    def __init__(self, input_dim=32, hidden_dim=16, output_dim=8,
                 speaker_code_dim=8, num_hidden_layers=2,
                 feed_layer_indices=(1, 2), hidden_gp_inducing_size=32,
                 speaker_gp_inducing_size=8, mode="add", seed=0,
                 max_lane_blocks=16):
        # TODO(synk): mode='concat' (speaker-feature concat) not implemented.
        assert mode == "add"
        self.speaker_code_dim = speaker_code_dim
        self.output_dim = output_dim
        self._max_lane_blocks = int(max_lane_blocks)   # tile cap = 128 * this; sweepable
        feed = tuple(feed_layer_indices)
        nl = num_hidden_layers

        key = jax.random.PRNGKey(seed)
        hidden, speakers = [], {}
        for i in range(nl + 1):
            key, kh, ks = jax.random.split(key, 3)
            in_dim = input_dim if i == 0 else hidden_dim
            out_dim = output_dim if i == nl else hidden_dim
            q_s = 1.0 if i == nl else 1e-6
            hidden.append(_make_svgp_layer(
                kh, in_dim, out_dim, hidden_gp_inducing_size, q_s,
                need_var=(i == nl)))
            if i in feed:
                speakers[i] = _make_svgp_layer(
                    ks, speaker_code_dim, hidden_dim,
                    speaker_gp_inducing_size, q_s, need_var=False)

        # Execution plan + flat parameter list in execution order.
        plan, flat = [], []
        for i in range(nl + 1):
            if i in feed:
                s = speakers[i]
                plan.append("spk_add")
                flat += [s["z_hat"], s["rhs_t"]]
            h = hidden[i]
            plan.append("mean" if i < nl else "final")
            flat += [h["z_hat"], h["rhs_t"]]

        self._plan = tuple(plan)
        self._flat_params = flat
        self._kernel = _make_fused_dgp_kernel(self._plan, output_dim)
        self._forward = jax.jit(self._forward_impl)

    # ----- tiling: batch on lanes, tiles of multiples of 128 lanes ----------
    def _pick_tile(self, n):
        nb = -(-n // 128)                          # 128-lane blocks needed
        steps = -(-nb // self._max_lane_blocks)    # cap lanes per tile
        if steps == 1 and nb >= 2:
            steps = 2                              # >=2 grid steps -> v7x megacore
        tb = -(-nb // steps)
        return tb * 128

    def _forward_impl(self, x):
        n = x.shape[0]
        spk = x[:, -self.speaker_code_dim:].astype(jnp.float32)
        f0 = x[:, :-self.speaker_code_dim].astype(jnp.float32)

        # Transpose so the batch dim sits on the lane axis (layout plumbing
        # done by XLA in the wrapper; the kernel sees lane-dense tiles).
        ft = f0.T                                  # (D0, N)
        spkt = spk.T                               # (Ds, N)

        tn = self._pick_tile(n)
        n_pad = -(-n // tn) * tn
        if n_pad != n:
            ft = jnp.pad(ft, ((0, 0), (0, n_pad - n)))
            spkt = jnp.pad(spkt, ((0, 0), (0, n_pad - n)))

        o = self.output_dim
        d_f, d_s = ft.shape[0], spkt.shape[0]

        in_specs = [
            pl.BlockSpec((d_f, tn), lambda i: (0, i)),      # f tile (batch on lanes)
            pl.BlockSpec((d_s, tn), lambda i: (0, i)),      # speaker tile
        ] + [
            # all layer params resident in VMEM (constant block index)
            pl.BlockSpec(p.shape, lambda i: (0, 0)) for p in self._flat_params
        ]

        out = pl.pallas_call(
            self._kernel,
            out_shape=jax.ShapeDtypeStruct((2 * o, n_pad), jnp.float32),
            grid=(n_pad // tn,),
            in_specs=in_specs,
            out_specs=pl.BlockSpec((2 * o, tn), lambda i: (0, i)),
            compiler_params=pltpu.CompilerParams(
                dimension_semantics=("parallel",)),
        )(ft, spkt, *self._flat_params)

        mean = out[:o, :n].T                      # (N, O)
        var = out[o:, :n].T                       # (N, O), isotropic across outputs
        return mean, var

    def forward(self, x):
        return self._forward(x)


if __name__ == "__main__":
    INPUT_DIM = 32          # feature dim of f (x has INPUT_DIM + SPK_DIM columns)
    SPK_DIM = 8
    BATCH = 8

    model = DGPPallas(input_dim=INPUT_DIM, hidden_dim=16, output_dim=8,
                      speaker_code_dim=SPK_DIM, num_hidden_layers=2,
                      feed_layer_indices=(1, 2), hidden_gp_inducing_size=32,
                      speaker_gp_inducing_size=8, mode="add", seed=0)

    key = jax.random.PRNGKey(0)
    x = jax.random.normal(key, (BATCH, INPUT_DIM + SPK_DIM), jnp.float32)

    mean, var = model.forward(x)
    jax.block_until_ready(mean)
    jax.block_until_ready(var)

    assert mean.shape == (BATCH, 8) and var.shape == (BATCH, 8)
    assert bool(jnp.all(jnp.isfinite(mean))) and bool(jnp.all(var > 0.0))
    print("KERNEL_OK")
</pallas_src>

<mosaic_0001>
module attributes {stable_mosaic.version = 11 : i64} {
  func.func @kernel(%arg0: i32, %arg1: memref<32x128xf32, #tpu.memory_space<vmem>>, %arg2: memref<8x128xf32, #tpu.memory_space<vmem>>, %arg3: memref<32x32xf32, #tpu.memory_space<vmem>>, %arg4: memref<16x32xf32, #tpu.memory_space<vmem>>, %arg5: memref<8x8xf32, #tpu.memory_space<vmem>>, %arg6: memref<16x8xf32, #tpu.memory_space<vmem>>, %arg7: memref<32x16xf32, #tpu.memory_space<vmem>>, %arg8: memref<16x32xf32, #tpu.memory_space<vmem>>, %arg9: memref<8x8xf32, #tpu.memory_space<vmem>>, %arg10: memref<16x8xf32, #tpu.memory_space<vmem>>, %arg11: memref<32x16xf32, #tpu.memory_space<vmem>>, %arg12: memref<40x32xf32, #tpu.memory_space<vmem>>, %arg13: memref<16x128xf32, #tpu.memory_space<vmem>>) attributes {dimension_semantics = [#tpu.dimension_semantics<parallel>], iteration_bounds = array<i64: 1>, scalar_prefetch = 0 : i64, scratch_operands = 0 : i64, tpu.core_type = #tpu.core_type<tc>, window_params = [{transform_indices = @transform_0, window_bounds = array<i64: 32, 128>}, {transform_indices = @transform_1, window_bounds = array<i64: 8, 128>}, {pipeline_mode = #tpu.pipeline_mode<synchronous>, transform_indices = @transform_2, window_bounds = array<i64: 32, 32>}, {pipeline_mode = #tpu.pipeline_mode<synchronous>, transform_indices = @transform_3, window_bounds = array<i64: 16, 32>}, {pipeline_mode = #tpu.pipeline_mode<synchronous>, transform_indices = @transform_4, window_bounds = array<i64: 8, 8>}, {pipeline_mode = #tpu.pipeline_mode<synchronous>, transform_indices = @transform_5, window_bounds = array<i64: 16, 8>}, {pipeline_mode = #tpu.pipeline_mode<synchronous>, transform_indices = @transform_6, window_bounds = array<i64: 32, 16>}, {pipeline_mode = #tpu.pipeline_mode<synchronous>, transform_indices = @transform_7, window_bounds = array<i64: 16, 32>}, {pipeline_mode = #tpu.pipeline_mode<synchronous>, transform_indices = @transform_8, window_bounds = array<i64: 8, 8>}, {pipeline_mode = #tpu.pipeline_mode<synchronous>, transform_indices = @transform_9, window_bounds = array<i64: 16, 8>}, {pipeline_mode = #tpu.pipeline_mode<synchronous>, transform_indices = @transform_10, window_bounds = array<i64: 32, 16>}, {pipeline_mode = #tpu.pipeline_mode<synchronous>, transform_indices = @transform_11, window_bounds = array<i64: 40, 32>}, {transform_indices = @transform_12, window_bounds = array<i64: 16, 128>}]} {
    %c0 = arith.constant 0 : index
    %c0_0 = arith.constant 0 : index
    %0 = vector.load %arg1[%c0, %c0_0] : memref<32x128xf32, #tpu.memory_space<vmem>>, vector<32x128xf32>
    %c0_1 = arith.constant 0 : index
    %c0_2 = arith.constant 0 : index
    %1 = vector.load %arg2[%c0_1, %c0_2] : memref<8x128xf32, #tpu.memory_space<vmem>>, vector<8x128xf32>
    %2 = arith.mulf %1, %1 : vector<8x128xf32>
    %cst = arith.constant dense<0.000000e+00> : vector<128xf32>
    %3 = vector.multi_reduction <add>, %2, %cst [0] : vector<8x128xf32> to vector<128xf32>
    %4 = vector.shape_cast %3 : vector<128xf32> to vector<1x128xf32>
    %cst_3 = arith.constant 1.000000e-24 : f32
    %5 = vector.broadcast %cst_3 : f32 to vector<1x128xf32>
    %6 = arith.maximumf %4, %5 : vector<1x128xf32>
    %7 = math.rsqrt %6 : vector<1x128xf32>
    %c0_4 = arith.constant 0 : index
    %c0_5 = arith.constant 0 : index
    %8 = vector.load %arg3[%c0_4, %c0_5] : memref<32x32xf32, #tpu.memory_space<vmem>>, vector<32x32xf32>
    %c0_6 = arith.constant 0 : index
    %c0_7 = arith.constant 0 : index
    %9 = vector.load %arg4[%c0_6, %c0_7] : memref<16x32xf32, #tpu.memory_space<vmem>>, vector<16x32xf32>
    %10 = arith.mulf %0, %0 : vector<32x128xf32>
    %cst_8 = arith.constant dense<0.000000e+00> : vector<128xf32>
    %11 = vector.multi_reduction <add>, %10, %cst_8 [0] : vector<32x128xf32> to vector<128xf32>
    %12 = vector.shape_cast %11 : vector<128xf32> to vector<1x128xf32>
    %cst_9 = arith.constant 1.000000e-24 : f32
    %13 = vector.broadcast %cst_9 : f32 to vector<1x128xf32>
    %14 = arith.maximumf %12, %13 : vector<1x128xf32>
    %15 = math.rsqrt %14 : vector<1x128xf32>
    %cst_10 = arith.constant dense<0.000000e+00> : vector<32x128xf32>
    %16 = tpu.matmul %8, %0, %cst_10 {dimension_numbers = #tpu.dot_dimension_numbers<[1], [0], [0], [1], [0, 0, 1, 1], [], []>} : vector<32x32xf32>, vector<32x128xf32>, vector<32x128xf32> -> vector<32x128xf32>
    %17 = vector.broadcast %15 : vector<1x128xf32> to vector<32x128xf32>
    %18 = arith.mulf %16, %17 : vector<32x128xf32>
    %cst_11 = arith.constant -1.000000e+00 : f32
    %cst_12 = arith.constant 1.000000e+00 : f32
    %19 = vector.broadcast %cst_11 : f32 to vector<32x128xf32>
    %20 = arith.maximumf %19, %18 : vector<32x128xf32>
    %21 = vector.broadcast %cst_12 : f32 to vector<32x128xf32>
    %22 = arith.minimumf %21, %20 : vector<32x128xf32>
    %23 = math.absf %22 : vector<32x128xf32>
    %cst_13 = arith.constant -1.872930e-02 : f32
    %24 = vector.broadcast %cst_13 : f32 to vector<32x128xf32>
    %25 = arith.mulf %23, %24 : vector<32x128xf32>
    %cst_14 = arith.constant 7.426100e-02 : f32
    %26 = vector.broadcast %cst_14 : f32 to vector<32x128xf32>
    %27 = arith.addf %26, %25 : vector<32x128xf32>
    %28 = arith.mulf %23, %27 : vector<32x128xf32>
    %cst_15 = arith.constant -0.212114394 : f32
    %29 = vector.broadcast %cst_15 : f32 to vector<32x128xf32>
    %30 = arith.addf %29, %28 : vector<32x128xf32>
    %31 = arith.mulf %23, %30 : vector<32x128xf32>
    %cst_16 = arith.constant 1.57072878 : f32
    %32 = vector.broadcast %cst_16 : f32 to vector<32x128xf32>
    %33 = arith.addf %32, %31 : vector<32x128xf32>
    %cst_17 = arith.constant 1.000000e+00 : f32
    %34 = vector.broadcast %cst_17 : f32 to vector<32x128xf32>
    %35 = arith.subf %34, %23 : vector<32x128xf32>
    %cst_18 = arith.constant 0.000000e+00 : f32
    %36 = vector.broadcast %cst_18 : f32 to vector<32x128xf32>
    %37 = arith.maximumf %35, %36 : vector<32x128xf32>
    %38 = math.sqrt %37 : vector<32x128xf32>
    %39 = arith.mulf %38, %33 : vector<32x128xf32>
    %cst_19 = arith.constant 0.000000e+00 : f32
    %40 = vector.broadcast %cst_19 : f32 to vector<32x128xf32>
    %41 = arith.cmpf oge, %22, %40 : vector<32x128xf32>
    %cst_20 = arith.constant 3.14159274 : f32
    %42 = vector.broadcast %cst_20 : f32 to vector<32x128xf32>
    %43 = arith.subf %42, %39 : vector<32x128xf32>
    %44 = arith.select %41, %39, %43 : vector<32x128xi1>, vector<32x128xf32>
    %45 = arith.mulf %16, %16 : vector<32x128xf32>
    %46 = vector.broadcast %12 : vector<1x128xf32> to vector<32x128xf32>
    %47 = arith.subf %46, %45 : vector<32x128xf32>
    %cst_21 = arith.constant 0.000000e+00 : f32
    %48 = vector.broadcast %cst_21 : f32 to vector<32x128xf32>
    %49 = arith.maximumf %47, %48 : vector<32x128xf32>
    %50 = math.sqrt %49 : vector<32x128xf32>
    %cst_22 = arith.constant 3.14159274 : f32
    %51 = vector.broadcast %cst_22 : f32 to vector<32x128xf32>
    %52 = arith.subf %51, %44 : vector<32x128xf32>
    %53 = arith.mulf %52, %16 : vector<32x128xf32>
    %54 = arith.addf %50, %53 : vector<32x128xf32>
    %cst_23 = arith.constant dense<0.000000e+00> : vector<16x128xf32>
    %55 = tpu.matmul %9, %54, %cst_23 {dimension_numbers = #tpu.dot_dimension_numbers<[1], [0], [0], [1], [0, 0, 1, 1], [], []>} : vector<16x32xf32>, vector<32x128xf32>, vector<16x128xf32> -> vector<16x128xf32>
    %c0_24 = arith.constant 0 : index
    %c0_25 = arith.constant 0 : index
    %56 = vector.load %arg5[%c0_24, %c0_25] : memref<8x8xf32, #tpu.memory_space<vmem>>, vector<8x8xf32>
    %c0_26 = arith.constant 0 : index
    %c0_27 = arith.constant 0 : index
    %57 = vector.load %arg6[%c0_26, %c0_27] : memref<16x8xf32, #tpu.memory_space<vmem>>, vector<16x8xf32>
    %cst_28 = arith.constant dense<0.000000e+00> : vector<8x128xf32>
    %58 = tpu.matmul %56, %1, %cst_28 {dimension_numbers = #tpu.dot_dimension_numbers<[1], [0], [0], [1], [0, 0, 1, 1], [], []>} : vector<8x8xf32>, vector<8x128xf32>, vector<8x128xf32> -> vector<8x128xf32>
    %59 = vector.broadcast %7 : vector<1x128xf32> to vector<8x128xf32>
    %60 = arith.mulf %58, %59 : vector<8x128xf32>
    %cst_29 = arith.constant -1.000000e+00 : f32
    %cst_30 = arith.constant 1.000000e+00 : f32
    %61 = vector.broadcast %cst_29 : f32 to vector<8x128xf32>
    %62 = arith.maximumf %61, %60 : vector<8x128xf32>
    %63 = vector.broadcast %cst_30 : f32 to vector<8x128xf32>
    %64 = arith.minimumf %63, %62 : vector<8x128xf32>
    %65 = math.absf %64 : vector<8x128xf32>
    %cst_31 = arith.constant -1.872930e-02 : f32
    %66 = vector.broadcast %cst_31 : f32 to vector<8x128xf32>
    %67 = arith.mulf %65, %66 : vector<8x128xf32>
    %cst_32 = arith.constant 7.426100e-02 : f32
    %68 = vector.broadcast %cst_32 : f32 to vector<8x128xf32>
    %69 = arith.addf %68, %67 : vector<8x128xf32>
    %70 = arith.mulf %65, %69 : vector<8x128xf32>
    %cst_33 = arith.constant -0.212114394 : f32
    %71 = vector.broadcast %cst_33 : f32 to vector<8x128xf32>
    %72 = arith.addf %71, %70 : vector<8x128xf32>
    %73 = arith.mulf %65, %72 : vector<8x128xf32>
    %cst_34 = arith.constant 1.57072878 : f32
    %74 = vector.broadcast %cst_34 : f32 to vector<8x128xf32>
    %75 = arith.addf %74, %73 : vector<8x128xf32>
    %cst_35 = arith.constant 1.000000e+00 : f32
    %76 = vector.broadcast %cst_35 : f32 to vector<8x128xf32>
    %77 = arith.subf %76, %65 : vector<8x128xf32>
    %cst_36 = arith.constant 0.000000e+00 : f32
    %78 = vector.broadcast %cst_36 : f32 to vector<8x128xf32>
    %79 = arith.maximumf %77, %78 : vector<8x128xf32>
    %80 = math.sqrt %79 : vector<8x128xf32>
    %81 = arith.mulf %80, %75 : vector<8x128xf32>
    %cst_37 = arith.constant 0.000000e+00 : f32
    %82 = vector.broadcast %cst_37 : f32 to vector<8x128xf32>
    %83 = arith.cmpf oge, %64, %82 : vector<8x128xf32>
    %cst_38 = arith.constant 3.14159274 : f32
    %84 = vector.broadcast %cst_38 : f32 to vector<8x128xf32>
    %85 = arith.subf %84, %81 : vector<8x128xf32>
    %86 = arith.select %83, %81, %85 : vector<8x128xi1>, vector<8x128xf32>
    %87 = arith.mulf %58, %58 : vector<8x128xf32>
    %88 = vector.broadcast %4 : vector<1x128xf32> to vector<8x128xf32>
    %89 = arith.subf %88, %87 : vector<8x128xf32>
    %cst_39 = arith.constant 0.000000e+00 : f32
    %90 = vector.broadcast %cst_39 : f32 to vector<8x128xf32>
    %91 = arith.maximumf %89, %90 : vector<8x128xf32>
    %92 = math.sqrt %91 : vector<8x128xf32>
    %cst_40 = arith.constant 3.14159274 : f32
    %93 = vector.broadcast %cst_40 : f32 to vector<8x128xf32>
    %94 = arith.subf %93, %86 : vector<8x128xf32>
    %95 = arith.mulf %94, %58 : vector<8x128xf32>
    %96 = arith.addf %92, %95 : vector<8x128xf32>
    %cst_41 = arith.constant dense<0.000000e+00> : vector<16x128xf32>
    %97 = tpu.matmul %57, %96, %cst_41 {dimension_numbers = #tpu.dot_dimension_numbers<[1], [0], [0], [1], [0, 0, 1, 1], [], []>} : vector<16x8xf32>, vector<8x128xf32>, vector<16x128xf32> -> vector<16x128xf32>
    %98 = arith.addf %55, %97 : vector<16x128xf32>
    %c0_42 = arith.constant 0 : index
    %c0_43 = arith.constant 0 : index
    %99 = vector.load %arg7[%c0_42, %c0_43] : memref<32x16xf32, #tpu.memory_space<vmem>>, vector<32x16xf32>
    %c0_44 = arith.constant 0 : index
    %c0_45 = arith.constant 0 : index
    %100 = vector.load %arg8[%c0_44, %c0_45] : memref<16x32xf32, #tpu.memory_space<vmem>>, vector<16x32xf32>
    %101 = arith.mulf %98, %98 : vector<16x128xf32>
    %cst_46 = arith.constant dense<0.000000e+00> : vector<128xf32>
    %102 = vector.multi_reduction <add>, %101, %cst_46 [0] : vector<16x128xf32> to vector<128xf32>
    %103 = vector.shape_cast %102 : vector<128xf32> to vector<1x128xf32>
    %cst_47 = arith.constant 1.000000e-24 : f32
    %104 = vector.broadcast %cst_47 : f32 to vector<1x128xf32>
    %105 = arith.maximumf %103, %104 : vector<1x128xf32>
    %106 = math.rsqrt %105 : vector<1x128xf32>
    %cst_48 = arith.constant dense<0.000000e+00> : vector<32x128xf32>
    %107 = tpu.matmul %99, %98, %cst_48 {dimension_numbers = #tpu.dot_dimension_numbers<[1], [0], [0], [1], [0, 0, 1, 1], [], []>} : vector<32x16xf32>, vector<16x128xf32>, vector<32x128xf32> -> vector<32x128xf32>
    %108 = vector.broadcast %106 : vector<1x128xf32> to vector<32x128xf32>
    %109 = arith.mulf %107, %108 : vector<32x128xf32>
    %cst_49 = arith.constant -1.000000e+00 : f32
    %cst_50 = arith.constant 1.000000e+00 : f32
    %110 = vector.broadcast %cst_49 : f32 to vector<32x128xf32>
    %111 = arith.maximumf %110, %109 : vector<32x128xf32>
    %112 = vector.broadcast %cst_50 : f32 to vector<32x128xf32>
    %113 = arith.minimumf %112, %111 : vector<32x128xf32>
    %114 = math.absf %113 : vector<32x128xf32>
    %cst_51 = arith.constant -1.872930e-02 : f32
    %115 = vector.broadcast %cst_51 : f32 to vector<32x128xf32>
    %116 = arith.mulf %114, %115 : vector<32x128xf32>
    %cst_52 = arith.constant 7.426100e-02 : f32
    %117 = vector.broadcast %cst_52 : f32 to vector<32x128xf32>
    %118 = arith.addf %117, %116 : vector<32x128xf32>
    %119 = arith.mulf %114, %118 : vector<32x128xf32>
    %cst_53 = arith.constant -0.212114394 : f32
    %120 = vector.broadcast %cst_53 : f32 to vector<32x128xf32>
    %121 = arith.addf %120, %119 : vector<32x128xf32>
    %122 = arith.mulf %114, %121 : vector<32x128xf32>
    %cst_54 = arith.constant 1.57072878 : f32
    %123 = vector.broadcast %cst_54 : f32 to vector<32x128xf32>
    %124 = arith.addf %123, %122 : vector<32x128xf32>
    %cst_55 = arith.constant 1.000000e+00 : f32
    %125 = vector.broadcast %cst_55 : f32 to vector<32x128xf32>
    %126 = arith.subf %125, %114 : vector<32x128xf32>
    %cst_56 = arith.constant 0.000000e+00 : f32
    %127 = vector.broadcast %cst_56 : f32 to vector<32x128xf32>
    %128 = arith.maximumf %126, %127 : vector<32x128xf32>
    %129 = math.sqrt %128 : vector<32x128xf32>
    %130 = arith.mulf %129, %124 : vector<32x128xf32>
    %cst_57 = arith.constant 0.000000e+00 : f32
    %131 = vector.broadcast %cst_57 : f32 to vector<32x128xf32>
    %132 = arith.cmpf oge, %113, %131 : vector<32x128xf32>
    %cst_58 = arith.constant 3.14159274 : f32
    %133 = vector.broadcast %cst_58 : f32 to vector<32x128xf32>
    %134 = arith.subf %133, %130 : vector<32x128xf32>
    %135 = arith.select %132, %130, %134 : vector<32x128xi1>, vector<32x128xf32>
    %136 = arith.mulf %107, %107 : vector<32x128xf32>
    %137 = vector.broadcast %103 : vector<1x128xf32> to vector<32x128xf32>
    %138 = arith.subf %137, %136 : vector<32x128xf32>
    %cst_59 = arith.constant 0.000000e+00 : f32
    %139 = vector.broadcast %cst_59 : f32 to vector<32x128xf32>
    %140 = arith.maximumf %138, %139 : vector<32x128xf32>
    %141 = math.sqrt %140 : vector<32x128xf32>
    %cst_60 = arith.constant 3.14159274 : f32
    %142 = vector.broadcast %cst_60 : f32 to vector<32x128xf32>
    %143 = arith.subf %142, %135 : vector<32x128xf32>
    %144 = arith.mulf %143, %107 : vector<32x128xf32>
    %145 = arith.addf %141, %144 : vector<32x128xf32>
    %cst_61 = arith.constant dense<0.000000e+00> : vector<16x128xf32>
    %146 = tpu.matmul %100, %145, %cst_61 {dimension_numbers = #tpu.dot_dimension_numbers<[1], [0], [0], [1], [0, 0, 1, 1], [], []>} : vector<16x32xf32>, vector<32x128xf32>, vector<16x128xf32> -> vector<16x128xf32>
    %c0_62 = arith.constant 0 : index
    %c0_63 = arith.constant 0 : index
    %147 = vector.load %arg9[%c0_62, %c0_63] : memref<8x8xf32, #tpu.memory_space<vmem>>, vector<8x8xf32>
    %c0_64 = arith.constant 0 : index
    %c0_65 = arith.constant 0 : index
    %148 = vector.load %arg10[%c0_64, %c0_65] : memref<16x8xf32, #tpu.memory_space<vmem>>, vector<16x8xf32>
    %cst_66 = arith.constant dense<0.000000e+00> : vector<8x128xf32>
    %149 = tpu.matmul %147, %1, %cst_66 {dimension_numbers = #tpu.dot_dimension_numbers<[1], [0], [0], [1], [0, 0, 1, 1], [], []>} : vector<8x8xf32>, vector<8x128xf32>, vector<8x128xf32> -> vector<8x128xf32>
    %150 = vector.broadcast %7 : vector<1x128xf32> to vector<8x128xf32>
    %151 = arith.mulf %149, %150 : vector<8x128xf32>
    %cst_67 = arith.constant -1.000000e+00 : f32
    %cst_68 = arith.constant 1.000000e+00 : f32
    %152 = vector.broadcast %cst_67 : f32 to vector<8x128xf32>
    %153 = arith.maximumf %152, %151 : vector<8x128xf32>
    %154 = vector.broadcast %cst_68 : f32 to vector<8x128xf32>
    %155 = arith.minimumf %154, %153 : vector<8x128xf32>
    %156 = math.absf %155 : vector<8x128xf32>
    %cst_69 = arith.constant -1.872930e-02 : f32
    %157 = vector.broadcast %cst_69 : f32 to vector<8x128xf32>
    %158 = arith.mulf %156, %157 : vector<8x128xf32>
    %cst_70 = arith.constant 7.426100e-02 : f32
    %159 = vector.broadcast %cst_70 : f32 to vector<8x128xf32>
    %160 = arith.addf %159, %158 : vector<8x128xf32>
    %161 = arith.mulf %156, %160 : vector<8x128xf32>
    %cst_71 = arith.constant -0.212114394 : f32
    %162 = vector.broadcast %cst_71 : f32 to vector<8x128xf32>
    %163 = arith.addf %162, %161 : vector<8x128xf32>
    %164 = arith.mulf %156, %163 : vector<8x128xf32>
    %cst_72 = arith.constant 1.57072878 : f32
    %165 = vector.broadcast %cst_72 : f32 to vector<8x128xf32>
    %166 = arith.addf %165, %164 : vector<8x128xf32>
    %cst_73 = arith.constant 1.000000e+00 : f32
    %167 = vector.broadcast %cst_73 : f32 to vector<8x128xf32>
    %168 = arith.subf %167, %156 : vector<8x128xf32>
    %cst_74 = arith.constant 0.000000e+00 : f32
    %169 = vector.broadcast %cst_74 : f32 to vector<8x128xf32>
    %170 = arith.maximumf %168, %169 : vector<8x128xf32>
    %171 = math.sqrt %170 : vector<8x128xf32>
    %172 = arith.mulf %171, %166 : vector<8x128xf32>
    %cst_75 = arith.constant 0.000000e+00 : f32
    %173 = vector.broadcast %cst_75 : f32 to vector<8x128xf32>
    %174 = arith.cmpf oge, %155, %173 : vector<8x128xf32>
    %cst_76 = arith.constant 3.14159274 : f32
    %175 = vector.broadcast %cst_76 : f32 to vector<8x128xf32>
    %176 = arith.subf %175, %172 : vector<8x128xf32>
    %177 = arith.select %174, %172, %176 : vector<8x128xi1>, vector<8x128xf32>
    %178 = arith.mulf %149, %149 : vector<8x128xf32>
    %179 = vector.broadcast %4 : vector<1x128xf32> to vector<8x128xf32>
    %180 = arith.subf %179, %178 : vector<8x128xf32>
    %cst_77 = arith.constant 0.000000e+00 : f32
    %181 = vector.broadcast %cst_77 : f32 to vector<8x128xf32>
    %182 = arith.maximumf %180, %181 : vector<8x128xf32>
    %183 = math.sqrt %182 : vector<8x128xf32>
    %cst_78 = arith.constant 3.14159274 : f32
    %184 = vector.broadcast %cst_78 : f32 to vector<8x128xf32>
    %185 = arith.subf %184, %177 : vector<8x128xf32>
    %186 = arith.mulf %185, %149 : vector<8x128xf32>
    %187 = arith.addf %183, %186 : vector<8x128xf32>
    %cst_79 = arith.constant dense<0.000000e+00> : vector<16x128xf32>
    %188 = tpu.matmul %148, %187, %cst_79 {dimension_numbers = #tpu.dot_dimension_numbers<[1], [0], [0], [1], [0, 0, 1, 1], [], []>} : vector<16x8xf32>, vector<8x128xf32>, vector<16x128xf32> -> vector<16x128xf32>
    %189 = arith.addf %146, %188 : vector<16x128xf32>
    %c0_80 = arith.constant 0 : index
    %c0_81 = arith.constant 0 : index
    %190 = vector.load %arg11[%c0_80, %c0_81] : memref<32x16xf32, #tpu.memory_space<vmem>>, vector<32x16xf32>
    %c0_82 = arith.constant 0 : index
    %c0_83 = arith.constant 0 : index
    %191 = vector.load %arg12[%c0_82, %c0_83] : memref<40x32xf32, #tpu.memory_space<vmem>>, vector<40x32xf32>
    %192 = arith.mulf %189, %189 : vector<16x128xf32>
    %cst_84 = arith.constant dense<0.000000e+00> : vector<128xf32>
    %193 = vector.multi_reduction <add>, %192, %cst_84 [0] : vector<16x128xf32> to vector<128xf32>
    %194 = vector.shape_cast %193 : vector<128xf32> to vector<1x128xf32>
    %cst_85 = arith.constant 1.000000e-24 : f32
    %195 = vector.broadcast %cst_85 : f32 to vector<1x128xf32>
    %196 = arith.maximumf %194, %195 : vector<1x128xf32>
    %197 = math.rsqrt %196 : vector<1x128xf32>
    %cst_86 = arith.constant dense<0.000000e+00> : vector<32x128xf32>
    %198 = tpu.matmul %190, %189, %cst_86 {dimension_numbers = #tpu.dot_dimension_numbers<[1], [0], [0], [1], [0, 0, 1, 1], [], []>} : vector<32x16xf32>, vector<16x128xf32>, vector<32x128xf32> -> vector<32x128xf32>
    %199 = vector.broadcast %197 : vector<1x128xf32> to vector<32x128xf32>
    %200 = arith.mulf %198, %199 : vector<32x128xf32>
    %cst_87 = arith.constant -1.000000e+00 : f32
    %cst_88 = arith.constant 1.000000e+00 : f32
    %201 = vector.broadcast %cst_87 : f32 to vector<32x128xf32>
    %202 = arith.maximumf %201, %200 : vector<32x128xf32>
    %203 = vector.broadcast %cst_88 : f32 to vector<32x128xf32>
    %204 = arith.minimumf %203, %202 : vector<32x128xf32>
    %205 = math.absf %204 : vector<32x128xf32>
    %cst_89 = arith.constant -1.872930e-02 : f32
    %206 = vector.broadcast %cst_89 : f32 to vector<32x128xf32>
    %207 = arith.mulf %205, %206 : vector<32x128xf32>
    %cst_90 = arith.constant 7.426100e-02 : f32
    %208 = vector.broadcast %cst_90 : f32 to vector<32x128xf32>
    %209 = arith.addf %208, %207 : vector<32x128xf32>
    %210 = arith.mulf %205, %209 : vector<32x128xf32>
    %cst_91 = arith.constant -0.212114394 : f32
    %211 = vector.broadcast %cst_91 : f32 to vector<32x128xf32>
    %212 = arith.addf %211, %210 : vector<32x128xf32>
    %213 = arith.mulf %205, %212 : vector<32x128xf32>
    %cst_92 = arith.constant 1.57072878 : f32
    %214 = vector.broadcast %cst_92 : f32 to vector<32x128xf32>
    %215 = arith.addf %214, %213 : vector<32x128xf32>
    %cst_93 = arith.constant 1.000000e+00 : f32
    %216 = vector.broadcast %cst_93 : f32 to vector<32x128xf32>
    %217 = arith.subf %216, %205 : vector<32x128xf32>
    %cst_94 = arith.constant 0.000000e+00 : f32
    %218 = vector.broadcast %cst_94 : f32 to vector<32x128xf32>
    %219 = arith.maximumf %217, %218 : vector<32x128xf32>
    %220 = math.sqrt %219 : vector<32x128xf32>
    %221 = arith.mulf %220, %215 : vector<32x128xf32>
    %cst_95 = arith.constant 0.000000e+00 : f32
    %222 = vector.broadcast %cst_95 : f32 to vector<32x128xf32>
    %223 = arith.cmpf oge, %204, %222 : vector<32x128xf32>
    %cst_96 = arith.constant 3.14159274 : f32
    %224 = vector.broadcast %cst_96 : f32 to vector<32x128xf32>
    %225 = arith.subf %224, %221 : vector<32x128xf32>
    %226 = arith.select %223, %221, %225 : vector<32x128xi1>, vector<32x128xf32>
    %227 = arith.mulf %198, %198 : vector<32x128xf32>
    %228 = vector.broadcast %194 : vector<1x128xf32> to vector<32x128xf32>
    %229 = arith.subf %228, %227 : vector<32x128xf32>
    %cst_97 = arith.constant 0.000000e+00 : f32
    %230 = vector.broadcast %cst_97 : f32 to vector<32x128xf32>
    %231 = arith.maximumf %229, %230 : vector<32x128xf32>
    %232 = math.sqrt %231 : vector<32x128xf32>
    %cst_98 = arith.constant 3.14159274 : f32
    %233 = vector.broadcast %cst_98 : f32 to vector<32x128xf32>
    %234 = arith.subf %233, %226 : vector<32x128xf32>
    %235 = arith.mulf %234, %198 : vector<32x128xf32>
    %236 = arith.addf %232, %235 : vector<32x128xf32>
    %cst_99 = arith.constant dense<0.000000e+00> : vector<40x128xf32>
    %237 = tpu.matmul %191, %236, %cst_99 {dimension_numbers = #tpu.dot_dimension_numbers<[1], [0], [0], [1], [0, 0, 1, 1], [], []>} : vector<40x32xf32>, vector<32x128xf32>, vector<40x128xf32> -> vector<40x128xf32>
    %238 = vector.extract_strided_slice %237 {offsets = [0, 0], sizes = [32, 128], strides = [1, 1]} : vector<40x128xf32> to vector<32x128xf32>
    %239 = vector.extract_strided_slice %237 {offsets = [32, 0], sizes = [8, 128], strides = [1, 1]} : vector<40x128xf32> to vector<8x128xf32>
    %240 = arith.mulf %238, %236 : vector<32x128xf32>
    %cst_100 = arith.constant dense<0.000000e+00> : vector<128xf32>
    %241 = vector.multi_reduction <add>, %240, %cst_100 [0] : vector<32x128xf32> to vector<128xf32>
    %242 = vector.shape_cast %241 : vector<128xf32> to vector<1x128xf32>
    %243 = arith.addf %194, %242 : vector<1x128xf32>
    %cst_101 = arith.constant 9.99999993E-9 : f32
    %244 = vector.broadcast %cst_101 : f32 to vector<1x128xf32>
    %245 = arith.maximumf %243, %244 : vector<1x128xf32>
    %c0_102 = arith.constant 0 : index
    %c0_103 = arith.constant 0 : index
    %246 = vector.load %arg13[%c0_102, %c0_103] : memref<16x128xf32, #tpu.memory_space<vmem>>, vector<8x128xf32>
    tpu.vector_store %arg13[%c0_102, %c0_103], %239 {strides = array<i32>} : memref<16x128xf32, #tpu.memory_space<vmem>>, vector<8x128xf32>,
    %247 = vector.shape_cast %245 : vector<1x128xf32> to vector<1x128xf32>
    %248 = vector.broadcast %247 : vector<1x128xf32> to vector<8x128xf32>
    %c8 = arith.constant 8 : index
    %c0_104 = arith.constant 0 : index
    %249 = vector.load %arg13[%c8, %c0_104] : memref<16x128xf32, #tpu.memory_space<vmem>>, vector<8x128xf32>
    tpu.vector_store %arg13[%c8, %c0_104], %248 {strides = array<i32>} : memref<16x128xf32, #tpu.memory_space<vmem>>, vector<8x128xf32>,
    return
  }
  func.func @transform_0(%arg0: i32) -> (i32, i32) {
    %c0_i32 = arith.constant 0 : i32
    %c0_i32_0 = arith.constant 0 : i32
    return %c0_i32, %arg0 : i32, i32
  }
  func.func @transform_1(%arg0: i32) -> (i32, i32) {
    %c0_i32 = arith.constant 0 : i32
    %c0_i32_0 = arith.constant 0 : i32
    return %c0_i32, %arg0 : i32, i32
  }
  func.func @transform_2(%arg0: i32) -> (i32, i32) {
    %c0_i32 = arith.constant 0 : i32
    %c0_i32_0 = arith.constant 0 : i32
    %c0_i32_1 = arith.constant 0 : i32
    return %c0_i32, %c0_i32_0 : i32, i32
  }
  func.func @transform_3(%arg0: i32) -> (i32, i32) {
    %c0_i32 = arith.constant 0 : i32
    %c0_i32_0 = arith.constant 0 : i32
    %c0_i32_1 = arith.constant 0 : i32
    return %c0_i32, %c0_i32_0 : i32, i32
  }
  func.func @transform_4(%arg0: i32) -> (i32, i32) {
    %c0_i32 = arith.constant 0 : i32
    %c0_i32_0 = arith.constant 0 : i32
    %c0_i32_1 = arith.constant 0 : i32
    return %c0_i32, %c0_i32_0 : i32, i32
  }
  func.func @transform_5(%arg0: i32) -> (i32, i32) {
    %c0_i32 = arith.constant 0 : i32
    %c0_i32_0 = arith.constant 0 : i32
    %c0_i32_1 = arith.constant 0 : i32
    return %c0_i32, %c0_i32_0 : i32, i32
  }
  func.func @transform_6(%arg0: i32) -> (i32, i32) {
    %c0_i32 = arith.constant 0 : i32
    %c0_i32_0 = arith.constant 0 : i32
    %c0_i32_1 = arith.constant 0 : i32
    return %c0_i32, %c0_i32_0 : i32, i32
  }
  func.func @transform_7(%arg0: i32) -> (i32, i32) {
    %c0_i32 = arith.constant 0 : i32
    %c0_i32_0 = arith.constant 0 : i32
    %c0_i32_1 = arith.constant 0 : i32
    return %c0_i32, %c0_i32_0 : i32, i32
  }
  func.func @transform_8(%arg0: i32) -> (i32, i32) {
    %c0_i32 = arith.constant 0 : i32
    %c0_i32_0 = arith.constant 0 : i32
    %c0_i32_1 = arith.constant 0 : i32
    return %c0_i32, %c0_i32_0 : i32, i32
  }
  func.func @transform_9(%arg0: i32) -> (i32, i32) {
    %c0_i32 = arith.constant 0 : i32
    %c0_i32_0 = arith.constant 0 : i32
    %c0_i32_1 = arith.constant 0 : i32
    return %c0_i32, %c0_i32_0 : i32, i32
  }
  func.func @transform_10(%arg0: i32) -> (i32, i32) {
    %c0_i32 = arith.constant 0 : i32
    %c0_i32_0 = arith.constant 0 : i32
    %c0_i32_1 = arith.constant 0 : i32
    return %c0_i32, %c0_i32_0 : i32, i32
  }
  func.func @transform_11(%arg0: i32) -> (i32, i32) {
    %c0_i32 = arith.constant 0 : i32
    %c0_i32_0 = arith.constant 0 : i32
    %c0_i32_1 = arith.constant 0 : i32
    return %c0_i32, %c0_i32_0 : i32, i32
  }
  func.func @transform_12(%arg0: i32) -> (i32, i32) {
    %c0_i32 = arith.constant 0 : i32
    %c0_i32_0 = arith.constant 0 : i32
    return %c0_i32, %arg0 : i32, i32
  }
}

</mosaic_0001>

<llo_original>
// kernel: _forward_impl.1
$region0: #{_forward_impl.1}
  #allocation0 [shape = 'u32[]', space=smem, size = 0x4, offset = 0x4, fixed_abs, tag = 'smem constant byte address 0x4 - core index']
  #allocation1 [shape = 'u32[72,128]{1,0:T(1,128)}', space=vmem, size = 0x9000, scoped, tag = 'internal scratch']
  %s0 = inlined_call_operand.vmem [shape: f32[32,128], index: 0, kind: input, shape index: {}]
  %s1 = inlined_call_operand.vmem [shape: f32[8,128], index: 1, kind: input, shape index: {}]
  %s2 = inlined_call_operand.vmem [shape: f32[32,32], index: 2, kind: input, shape index: {}]
  %s3 = inlined_call_operand.vmem [shape: f32[16,32], index: 3, kind: input, shape index: {}]
  %s4 = inlined_call_operand.hbm [shape: f32[8,8], index: 4, kind: input, shape index: {}]
  %s5 = inlined_call_operand.vmem [shape: f32[16,8], index: 5, kind: input, shape index: {}]
  %s6 = inlined_call_operand.vmem [shape: f32[32,16], index: 6, kind: input, shape index: {}]
  %s7 = inlined_call_operand.vmem [shape: f32[16,32], index: 7, kind: input, shape index: {}]
  %s8 = inlined_call_operand.vmem [shape: f32[8,8], index: 8, kind: input, shape index: {}]
  %s9 = inlined_call_operand.vmem [shape: f32[16,8], index: 9, kind: input, shape index: {}]
  %s10 = inlined_call_operand.vmem [shape: f32[32,16], index: 10, kind: input, shape index: {}]
  %s11 = inlined_call_operand.vmem [shape: f32[40,32], index: 11, kind: input, shape index: {}]
  %s12 = inlined_call_operand.vmem [shape: f32[16,128], index: 12, kind: output, shape index: {}]
  %s13 = sld [smem:[#allocation0]]
  $region62: #{_forward_impl.1} parent=0
    _
  %s15 = ssub.s32 1, %s13
  %s16 = scalar_select 0, %s15, %s13
  $region1: #{_forward_impl.1} parent=0
    #allocation2 [shape = 'u8[4096]{0}', space=vmem, size = 0x1000, scoped, tag = 'input window, operand 4, single buffered']
    #allocation3 [shape = 's32[1]{0}', space=sflag, size = 0x4, scoped, tag = 'scoped memory for _forward_impl.1']
    %17 = vsyncpa [#allocation3], 0
    // Predicated region
    $region2: #{_forward_impl.1} parent=1 // pred_check
      _
    $region3: #{_forward_impl.1} parent=1 // pred_check_branch
      %19 = sbr.rel (0) target = $region5
    $region4: #{_forward_impl.1} parent=1 // pred_region
      _
    $region5: #{_forward_impl.1} parent=1 // pred_fallthru
      _
    // Predicated region
    $region6: #{_forward_impl.1} parent=1 // pred_check
      _
    $region7: #{_forward_impl.1} parent=1 // pred_check_branch
      %21 = sbr.rel (0) target = $region9
    $region8: #{_forward_impl.1} parent=1 // pred_region
      _
    $region9: #{_forward_impl.1} parent=1 // pred_fallthru
      _
    // Predicated region
    $region10: #{_forward_impl.1} parent=1 // pred_check
      _
    $region11: #{_forward_impl.1} parent=1 // pred_check_branch
      %23 = sbr.rel (0) target = $region13
    $region12: #{_forward_impl.1} parent=1 // pred_region
      _
    $region13: #{_forward_impl.1} parent=1 // pred_fallthru
      _
    // Predicated region
    $region14: #{_forward_impl.1} parent=1 // pred_check
      _
    $region15: #{_forward_impl.1} parent=1 // pred_check_branch
      %25 = sbr.rel (0) target = $region17
    $region16: #{_forward_impl.1} parent=1 // pred_region
      _
    $region17: #{_forward_impl.1} parent=1 // pred_fallthru
      _
    // Predicated region
    $region18: #{_forward_impl.1} parent=1 // pred_check
      _
    $region19: #{_forward_impl.1} parent=1 // pred_check_branch
      %27 = sbr.rel (0) target = $region21
    $region20: #{_forward_impl.1} parent=1 // pred_region
      %29 = vsyncadd [#allocation3], 0
      %s31 = sshll.u32 %s4, 4
      %s32 = int_to_ptr.hbm [resolvable:$true] %s31
      %s33 = sshll.u32 [#allocation2], 4
      %s34 = int_to_ptr.vmem [resolvable:$true] %s33
      %36 = dma.hbm_to_vmem [thread:$0]  %s32, 128, %s34, [#allocation3]
    $region21: #{_forward_impl.1} parent=1 // pred_fallthru
      _
    // Predicated region
    $region22: #{_forward_impl.1} parent=1 // pred_check
      _
    $region23: #{_forward_impl.1} parent=1 // pred_check_branch
      %38 = sbr.rel (0) target = $region25
    $region24: #{_forward_impl.1} parent=1 // pred_region
      _
    $region25: #{_forward_impl.1} parent=1 // pred_fallthru
      _
    // Predicated region
    $region26: #{_forward_impl.1} parent=1 // pred_check
      _
    $region27: #{_forward_impl.1} parent=1 // pred_check_branch
      %40 = sbr.rel (0) target = $region29
    $region28: #{_forward_impl.1} parent=1 // pred_region
      _
    $region29: #{_forward_impl.1} parent=1 // pred_fallthru
      _
    // Predicated region
    $region30: #{_forward_impl.1} parent=1 // pred_check
      _
    $region31: #{_forward_impl.1} parent=1 // pred_check_branch
      %42 = sbr.rel (0) target = $region33
    $region32: #{_forward_impl.1} parent=1 // pred_region
      _
    $region33: #{_forward_impl.1} parent=1 // pred_fallthru
      _
    // Predicated region
    $region34: #{_forward_impl.1} parent=1 // pred_check
      _
    $region35: #{_forward_impl.1} parent=1 // pred_check_branch
      %44 = sbr.rel (0) target = $region37
    $region36: #{_forward_impl.1} parent=1 // pred_region
      _
    $region37: #{_forward_impl.1} parent=1 // pred_fallthru
      _
    // Predicated region
    $region38: #{_forward_impl.1} parent=1 // pred_check
      _
    $region39: #{_forward_impl.1} parent=1 // pred_check_branch
      %46 = sbr.rel (0) target = $region41
    $region40: #{_forward_impl.1} parent=1 // pred_region
      _
    $region41: #{_forward_impl.1} parent=1 // pred_fallthru
      _
    // Predicated region
    $region42: #{_forward_impl.1} parent=1 // pred_check
      _
    $region43: #{_forward_impl.1} parent=1 // pred_check_branch
      %48 = sbr.rel (0) target = $region45
    $region44: #{_forward_impl.1} parent=1 // pred_region
      _
    $region45: #{_forward_impl.1} parent=1 // pred_fallthru
      _
    // Predicated region
    $region46: #{_forward_impl.1} parent=1 // pred_check
      _
    $region47: #{_forward_impl.1} parent=1 // pred_check_branch
      %50 = sbr.rel (0) target = $region49
    $region48: #{_forward_impl.1} parent=1 // pred_region
      _
    $region49: #{_forward_impl.1} parent=1 // pred_fallthru
      _
    // Predicated region
    $region50: #{_forward_impl.1} parent=1 // pred_check
      _
    $region51: #{_forward_impl.1} parent=1 // pred_check_branch
      %52 = sbr.rel (0) target = $region53
    $region52: #{_forward_impl.1} parent=1 // pred_region
      %54 = dma.done [#allocation3], 128
    $region53: #{_forward_impl.1} parent=1 // pred_fallthru
      _
    %v55 = vld [vmem:[%s0] sm:$0xff]
    %v56 = vld [vmem:[%s0 + $0x8] sm:$0xff]
    %v57 = vld [vmem:[%s0 + $0x10] sm:$0xff]
    %v58 = vld [vmem:[%s0 + $0x18] sm:$0xff]
    %v59 = vld [vmem:[%s1] sm:$0xff]
    %v60 = vmul.f32 %v59, %v59
    %v61 = vrot.slane %v60, 4
    %v62 = vadd.f32 %v60, %v61
    %v63 = vrot.slane %v62, 2
    %v64 = vadd.f32 %v62, %v63
    %v65 = vrot.slane %v64, 1
    %v66 = vadd.f32 %v64, %v65
    %v67 = vmax.f32 %v66, 1e-24
    %v68 = vrsqrt.pop %v67
    %v69 = vmul.f32 %v68, %v67
    %v70 = vmul.f32 %v69, %v68
    %v71 = vmul.f32 0.5, %v70
    %v72 = vsub.f32 1.5, %v71
    %v73 = vmul.f32 %v68, %v72
    %vm74 = vweird.f32 %v67
    %vm75 = vweird.f32 %v68
    %vm76 = vmor %vm74, %vm75
    %v77 = vsel %vm76, %v68, %v73
    %v78 = vld [vmem:[%s2] sm:$0xff]
    %v79 = vld [vmem:[%s2 + $0x8] sm:$0xff]
    %v80 = vld [vmem:[%s2 + $0x10] sm:$0xff]
    %v81 = vld [vmem:[%s2 + $0x18] sm:$0xff]
    %v82 = vld [vmem:[%s3] sm:$0xff]
    %v83 = vld [vmem:[%s3 + $0x8] sm:$0xff]
    %v84 = vmul.f32 %v55, %v55
    %v85 = vmul.f32 %v56, %v56
    %v86 = vmul.f32 %v57, %v57
    %v87 = vmul.f32 %v58, %v58
    %v88 = vadd.f32 %v84, %v85
    %v89 = vadd.f32 %v88, %v86
    %v90 = vadd.f32 %v89, %v87
    %v91 = vrot.slane %v90, 4
    %v92 = vadd.f32 %v90, %v91
    %v93 = vrot.slane %v92, 2
    %v94 = vadd.f32 %v92, %v93
    %v95 = vrot.slane %v94, 1
    %v96 = vadd.f32 %v94, %v95
    %v97 = vmax.f32 %v96, 1e-24
    %v98 = vrsqrt.pop %v97
    %v99 = vmul.f32 %v98, %v97
    %v100 = vmul.f32 %v99, %v98
    %v101 = vmul.f32 0.5, %v100
    %v102 = vsub.f32 1.5, %v101
    %v103 = vmul.f32 %v98, %v102
    %vm104 = vweird.f32 %v97
    %vm105 = vweird.f32 %v98
    %vm106 = vmor %vm104, %vm105
    %v107 = vsel %vm106, %v98, %v103
    %vm108 = vcmask 261120
    %v110 = vsel %vm108, %v78, 0
    %v113 = vsel %vm108, %v79, 0
    %v116 = vsel %vm108, %v80, 0
    %v119 = vsel %vm108, %v81, 0
    %121 = vmatpush.msra.mxu0 0.0
    %122 = vmatpush.msra.mxu0 0.0
    %123 = vmatpush.msra.mxu0 0.0
    %124 = vmatpush.msra.mxu0 0.0
    %125 = vmatpush.msra.mxu0 0.0
    %126 = vmatpush.msra.mxu0 0.0
    %127 = vmatpush.msra.mxu0 0.0
    %128 = vmatpush.msra.mxu0 0.0
    %129 = vmatpush.msra.mxu0 0.0
    %130 = vmatpush.msra.mxu0 0.0
    %131 = vmatpush.msra.mxu0 0.0
    %132 = vmatpush.msra.mxu0 0.0
    %133 = vmatpush.msra.mxu0 %v58
    %134 = vmatpush.msra.mxu0 %v57
    %135 = vmatpush.msra.mxu0 %v56
    %136 = vmatpush.msra.mxu0 %v55
    %137 = vmatmul.f32.gmra.mxu0 %v110
    %v138 = vpop.f32.mrf.mxu0
    %v139 = vadd.f32 0.0, %v138
    %140 = vmatmul.f32.gmra.mxu0 %v113
    %v141 = vpop.f32.mrf.mxu0
    %v142 = vadd.f32 0.0, %v141
    %143 = vmatmul.f32.gmra.mxu0 %v116
    %v144 = vpop.f32.mrf.mxu0
    %v145 = vadd.f32 0.0, %v144
    %146 = vmatmul.f32.gmra.mxu0 %v119
    %v147 = vpop.f32.mrf.mxu0
    %v148 = vadd.f32 0.0, %v147
    %149 = vdwg.mxu0
    %v150 = vmul.f32 %v139, %v107
    %v151 = vmul.f32 %v142, %v107
    %v152 = vmul.f32 %v145, %v107
    %v153 = vmul.f32 %v148, %v107
    %v154 = vmax.f32 %v150, -1.0
    %v155 = vmax.f32 %v151, -1.0
    %v156 = vmax.f32 %v152, -1.0
    %v157 = vmax.f32 %v153, -1.0
    %v158 = vmin.f32 %v154, 1.0
    %v159 = vmin.f32 %v155, 1.0
    %v160 = vmin.f32 %v156, 1.0
    %v161 = vmin.f32 %v157, 1.0
    %v162 = vand.u32 2147483647, %v158
    %v163 = vand.u32 2147483647, %v159
    %v164 = vand.u32 2147483647, %v160
    %v165 = vand.u32 2147483647, %v161
    %v166 = vmul.f32 %v162, -0.0187293
    %v167 = vmul.f32 %v163, -0.0187293
    %v168 = vmul.f32 %v164, -0.0187293
    %v169 = vmul.f32 %v165, -0.0187293
    %v170 = vadd.f32 %v166, 0.074261
    %v171 = vadd.f32 %v167, 0.074261
    %v172 = vadd.f32 %v168, 0.074261
    %v173 = vadd.f32 %v169, 0.074261
    %v174 = vmul.f32 %v162, %v170
    %v175 = vmul.f32 %v163, %v171
    %v176 = vmul.f32 %v164, %v172
    %v177 = vmul.f32 %v165, %v173
    %v178 = vadd.f32 %v174, -0.2121144
    %v179 = vadd.f32 %v175, -0.2121144
    %v180 = vadd.f32 %v176, -0.2121144
    %v181 = vadd.f32 %v177, -0.2121144
    %v182 = vmul.f32 %v162, %v178
    %v183 = vmul.f32 %v163, %v179
    %v184 = vmul.f32 %v164, %v180
    %v185 = vmul.f32 %v165, %v181
    %v186 = vadd.f32 %v182, 1.5707288
    %v187 = vadd.f32 %v183, 1.5707288
    %v188 = vadd.f32 %v184, 1.5707288
    %v189 = vadd.f32 %v185, 1.5707288
    %v190 = vsub.f32 1.0, %v162
    %v191 = vsub.f32 1.0, %v163
    %v192 = vsub.f32 1.0, %v164
    %v193 = vsub.f32 1.0, %v165
    %v194 = vmax.f32 %v190, 0.0
    %v195 = vmax.f32 %v191, 0.0
    %v196 = vmax.f32 %v192, 0.0
    %v197 = vmax.f32 %v193, 0.0
    %v198 = vrsqrt.pop %v194
    %v199 = vmul.f32 %v198, %v194
    %v200 = vmul.f32 %v199, %v198
    %v201 = vmul.f32 0.5, %v200
    %v202 = vsub.f32 1.5, %v201
    %v203 = vmul.f32 %v198, %v202
    %v204 = vmul.f32 %v194, %v203
    %vm205 = vcmp.eq.f32.partialorder %v194, inf
    %v206 = vsel %vm205, %v194, %v204
    %vm207 = vcmp.eq.f32.partialorder %v194, 0.0
    %v208 = vand.u32 %v194, 2147483648
    %v209 = vsel %vm207, %v208, %v206
    %v210 = vrsqrt.pop %v195
    %v211 = vmul.f32 %v210, %v195
    %v212 = vmul.f32 %v211, %v210
    %v213 = vmul.f32 0.5, %v212
    %v214 = vsub.f32 1.5, %v213
    %v215 = vmul.f32 %v210, %v214
    %v216 = vmul.f32 %v195, %v215
    %vm217 = vcmp.eq.f32.partialorder %v195, inf
    %v218 = vsel %vm217, %v195, %v216
    %vm219 = vcmp.eq.f32.partialorder %v195, 0.0
    %v220 = vand.u32 %v195, 2147483648
    %v221 = vsel %vm219, %v220, %v218
    %v222 = vrsqrt.pop %v196
    %v223 = vmul.f32 %v222, %v196
    %v224 = vmul.f32 %v223, %v222
    %v225 = vmul.f32 0.5, %v224
    %v226 = vsub.f32 1.5, %v225
    %v227 = vmul.f32 %v222, %v226
    %v228 = vmul.f32 %v196, %v227
    %vm229 = vcmp.eq.f32.partialorder %v196, inf
    %v230 = vsel %vm229, %v196, %v228
    %vm231 = vcmp.eq.f32.partialorder %v196, 0.0
    %v232 = vand.u32 %v196, 2147483648
    %v233 = vsel %vm231, %v232, %v230
    %v234 = vrsqrt.pop %v197
    %v235 = vmul.f32 %v234, %v197
    %v236 = vmul.f32 %v235, %v234
    %v237 = vmul.f32 0.5, %v236
    %v238 = vsub.f32 1.5, %v237
    %v239 = vmul.f32 %v234, %v238
    %v240 = vmul.f32 %v197, %v239
    %vm241 = vcmp.eq.f32.partialorder %v197, inf
    %v242 = vsel %vm241, %v197, %v240
    %vm243 = vcmp.eq.f32.partialorder %v197, 0.0
    %v244 = vand.u32 %v197, 2147483648
    %v245 = vsel %vm243, %v244, %v242
    %v246 = vmul.f32 %v209, %v186
    %v247 = vmul.f32 %v221, %v187
    %v248 = vmul.f32 %v233, %v188
    %v249 = vmul.f32 %v245, %v189
    %vm250 = vcmp.ge.f32.partialorder %v158, 0.0
    %vm251 = vcmp.ge.f32.partialorder %v159, 0.0
    %vm252 = vcmp.ge.f32.partialorder %v160, 0.0
    %vm253 = vcmp.ge.f32.partialorder %v161, 0.0
    %v254 = vsub.f32 3.1415927, %v246
    %v255 = vsub.f32 3.1415927, %v247
    %v256 = vsub.f32 3.1415927, %v248
    %v257 = vsub.f32 3.1415927, %v249
    %v258 = vsel %vm250, %v246, %v254
    %v259 = vsel %vm251, %v247, %v255
    %v260 = vsel %vm252, %v248, %v256
    %v261 = vsel %vm253, %v249, %v257
    %v262 = vmul.f32 %v139, %v139
    %v263 = vmul.f32 %v142, %v142
    %v264 = vmul.f32 %v145, %v145
    %v265 = vmul.f32 %v148, %v148
    %v266 = vsub.f32 %v96, %v262
    %v267 = vsub.f32 %v96, %v263
    %v268 = vsub.f32 %v96, %v264
    %v269 = vsub.f32 %v96, %v265
    %v270 = vmax.f32 %v266, 0.0
    %v271 = vmax.f32 %v267, 0.0
    %v272 = vmax.f32 %v268, 0.0
    %v273 = vmax.f32 %v269, 0.0
    %v274 = vrsqrt.pop %v270
    %v275 = vmul.f32 %v274, %v270
    %v276 = vmul.f32 %v275, %v274
    %v277 = vmul.f32 0.5, %v276
    %v278 = vsub.f32 1.5, %v277
    %v279 = vmul.f32 %v274, %v278
    %v280 = vmul.f32 %v270, %v279
    %vm281 = vcmp.eq.f32.partialorder %v270, inf
    %v282 = vsel %vm281, %v270, %v280
    %vm283 = vcmp.eq.f32.partialorder %v270, 0.0
    %v284 = vand.u32 %v270, 2147483648
    %v285 = vsel %vm283, %v284, %v282
    %v286 = vrsqrt.pop %v271
    %v287 = vmul.f32 %v286, %v271
    %v288 = vmul.f32 %v287, %v286
    %v289 = vmul.f32 0.5, %v288
    %v290 = vsub.f32 1.5, %v289
    %v291 = vmul.f32 %v286, %v290
    %v292 = vmul.f32 %v271, %v291
    %vm293 = vcmp.eq.f32.partialorder %v271, inf
    %v294 = vsel %vm293, %v271, %v292
    %vm295 = vcmp.eq.f32.partialorder %v271, 0.0
    %v296 = vand.u32 %v271, 2147483648
    %v297 = vsel %vm295, %v296, %v294
    %v298 = vrsqrt.pop %v272
    %v299 = vmul.f32 %v298, %v272
    %v300 = vmul.f32 %v299, %v298
    %v301 = vmul.f32 0.5, %v300
    %v302 = vsub.f32 1.5, %v301
    %v303 = vmul.f32 %v298, %v302
    %v304 = vmul.f32 %v272, %v303
    %vm305 = vcmp.eq.f32.partialorder %v272, inf
    %v306 = vsel %vm305, %v272, %v304
    %vm307 = vcmp.eq.f32.partialorder %v272, 0.0
    %v308 = vand.u32 %v272, 2147483648
    %v309 = vsel %vm307, %v308, %v306
    %v310 = vrsqrt.pop %v273
    %v311 = vmul.f32 %v310, %v273
    %v312 = vmul.f32 %v311, %v310
    %v313 = vmul.f32 0.5, %v312
    %v314 = vsub.f32 1.5, %v313
    %v315 = vmul.f32 %v310, %v314
    %v316 = vmul.f32 %v273, %v315
    %vm317 = vcmp.eq.f32.partialorder %v273, inf
    %v318 = vsel %vm317, %v273, %v316
    %vm319 = vcmp.eq.f32.partialorder %v273, 0.0
    %v320 = vand.u32 %v273, 2147483648
    %v321 = vsel %vm319, %v320, %v318
    %v322 = vsub.f32 3.1415927, %v258
    %v323 = vsub.f32 3.1415927, %v259
    %v324 = vsub.f32 3.1415927, %v260
    %v325 = vsub.f32 3.1415927, %v261
    %v326 = vmul.f32 %v322, %v139
    %v327 = vmul.f32 %v323, %v142
    %v328 = vmul.f32 %v324, %v145
    %v329 = vmul.f32 %v325, %v148
    %v330 = vadd.f32 %v285, %v326
    %v331 = vadd.f32 %v297, %v327
    %v332 = vadd.f32 %v309, %v328
    %v333 = vadd.f32 %v321, %v329
    %v334 = vld [vmem:[#allocation2] sm:$0xff]
    %v335 = vld [vmem:[%s5] sm:$0xff]
    %v336 = vld [vmem:[%s5 + $0x8] sm:$0xff]
    %vm337 = vcmask 64512
    %v339 = vsel %vm337, %v334, 0
    %341 = vmatpush.msra.mxu0 0.0
    %342 = vmatpush.msra.mxu0 0.0
    %343 = vmatpush.msra.mxu0 0.0
    %344 = vmatpush.msra.mxu0 0.0
    %345 = vmatpush.msra.mxu0 0.0
    %346 = vmatpush.msra.mxu0 0.0
    %347 = vmatpush.msra.mxu0 0.0
    %348 = vmatpush.msra.mxu0 0.0
    %349 = vmatpush.msra.mxu0 0.0
    %350 = vmatpush.msra.mxu0 0.0
    %351 = vmatpush.msra.mxu0 0.0
    %352 = vmatpush.msra.mxu0 0.0
    %353 = vmatpush.msra.mxu0 0.0
    %354 = vmatpush.msra.mxu0 0.0
    %355 = vmatpush.msra.mxu0 0.0
    %356 = vmatpush.msra.mxu0 %v59
    %357 = vmatmul.f32.gmra.mxu0 %v339
    %v358 = vpop.f32.mrf.mxu0
    %v359 = vadd.f32 0.0, %v358
    %360 = vdwg.mxu0
    %v361 = vmul.f32 %v359, %v77
    %v362 = vmax.f32 %v361, -1.0
    %v363 = vmin.f32 %v362, 1.0
    %v364 = vand.u32 2147483647, %v363
    %v365 = vmul.f32 %v364, -0.0187293
    %v366 = vadd.f32 %v365, 0.074261
    %v367 = vmul.f32 %v364, %v366
    %v368 = vadd.f32 %v367, -0.2121144
    %v369 = vmul.f32 %v364, %v368
    %v370 = vadd.f32 %v369, 1.5707288
    %v371 = vsub.f32 1.0, %v364
    %v372 = vmax.f32 %v371, 0.0
    %v373 = vrsqrt.pop %v372
    %v374 = vmul.f32 %v373, %v372
    %v375 = vmul.f32 %v374, %v373
    %v376 = vmul.f32 0.5, %v375
    %v377 = vsub.f32 1.5, %v376
    %v378 = vmul.f32 %v373, %v377
    %v379 = vmul.f32 %v372, %v378
    %vm380 = vcmp.eq.f32.partialorder %v372, inf
    %v381 = vsel %vm380, %v372, %v379
    %vm382 = vcmp.eq.f32.partialorder %v372, 0.0
    %v383 = vand.u32 %v372, 2147483648
    %v384 = vsel %vm382, %v383, %v381
    %v385 = vmul.f32 %v384, %v370
    %vm386 = vcmp.ge.f32.partialorder %v363, 0.0
    %v387 = vsub.f32 3.1415927, %v385
    %v388 = vsel %vm386, %v385, %v387
    %v389 = vmul.f32 %v359, %v359
    %v390 = vsub.f32 %v66, %v389
    %v391 = vmax.f32 %v390, 0.0
    %v392 = vrsqrt.pop %v391
    %v393 = vmul.f32 %v392, %v391
    %v394 = vmul.f32 %v393, %v392
    %v395 = vmul.f32 0.5, %v394
    %v396 = vsub.f32 1.5, %v395
    %v397 = vmul.f32 %v392, %v396
    %v398 = vmul.f32 %v391, %v397
    %vm399 = vcmp.eq.f32.partialorder %v391, inf
    %v400 = vsel %vm399, %v391, %v398
    %vm401 = vcmp.eq.f32.partialorder %v391, 0.0
    %v402 = vand.u32 %v391, 2147483648
    %v403 = vsel %vm401, %v402, %v400
    %v404 = vsub.f32 3.1415927, %v388
    %v405 = vmul.f32 %v404, %v359
    %v406 = vadd.f32 %v403, %v405
    %v408 = vsel %vm337, %v335, 0
    %v411 = vsel %vm337, %v336, 0
    %413 = vmatpush.msra.mxu0 0.0
    %414 = vmatpush.msra.mxu0 0.0
    %415 = vmatpush.msra.mxu0 0.0
    %416 = vmatpush.msra.mxu0 0.0
    %417 = vmatpush.msra.mxu0 0.0
    %418 = vmatpush.msra.mxu0 0.0
    %419 = vmatpush.msra.mxu0 0.0
    %420 = vmatpush.msra.mxu0 0.0
    %421 = vmatpush.msra.mxu0 0.0
    %422 = vmatpush.msra.mxu0 0.0
    %423 = vmatpush.msra.mxu0 0.0
    %424 = vmatpush.msra.mxu0 0.0
    %425 = vmatpush.msra.mxu0 0.0
    %426 = vmatpush.msra.mxu0 0.0
    %427 = vmatpush.msra.mxu0 0.0
    %428 = vmatpush.msra.mxu0 %v406
    %429 = vmatmul.f32.gmra.mxu0 %v408
    %v430 = vpop.f32.mrf.mxu0
    %v431 = vadd.f32 0.0, %v430
    %432 = vmatmul.f32.gmra.mxu0 %v411
    %v433 = vpop.f32.mrf.mxu0
    %v434 = vadd.f32 0.0, %v433
    %435 = vdwg.mxu0
    %v437 = vsel %vm108, %v82, 0
    %v440 = vsel %vm108, %v83, 0
    %442 = vmatpush.msra.mxu0 0.0
    %443 = vmatpush.msra.mxu0 0.0
    %444 = vmatpush.msra.mxu0 0.0
    %445 = vmatpush.msra.mxu0 0.0
    %446 = vmatpush.msra.mxu0 0.0
    %447 = vmatpush.msra.mxu0 0.0
    %448 = vmatpush.msra.mxu0 0.0
    %449 = vmatpush.msra.mxu0 0.0
    %450 = vmatpush.msra.mxu0 0.0
    %451 = vmatpush.msra.mxu0 0.0
    %452 = vmatpush.msra.mxu0 0.0
    %453 = vmatpush.msra.mxu0 0.0
    %454 = vmatpush.msra.mxu0 %v333
    %455 = vmatpush.msra.mxu0 %v332
    %456 = vmatpush.msra.mxu0 %v331
    %457 = vmatpush.msra.mxu0 %v330
    %458 = vmatmul.f32.gmra.mxu0 %v437
    %v459 = vpop.f32.mrf.mxu0
    %v460 = vadd.f32 %v431, %v459
    %461 = vmatmul.f32.gmra.mxu0 %v440
    %v462 = vpop.f32.mrf.mxu0
    %v463 = vadd.f32 %v434, %v462
    %464 = vdwg.mxu0
    %v465 = vld [vmem:[%s6] sm:$0xff]
    %v466 = vld [vmem:[%s6 + $0x8] sm:$0xff]
    %v467 = vld [vmem:[%s6 + $0x10] sm:$0xff]
    %v468 = vld [vmem:[%s6 + $0x18] sm:$0xff]
    %v469 = vld [vmem:[%s7] sm:$0xff]
    %v470 = vld [vmem:[%s7 + $0x8] sm:$0xff]
    %v471 = vmul.f32 %v460, %v460
    %v472 = vmul.f32 %v463, %v463
    %v473 = vadd.f32 %v471, %v472
    %v474 = vrot.slane %v473, 4
    %v475 = vadd.f32 %v473, %v474
    %v476 = vrot.slane %v475, 2
    %v477 = vadd.f32 %v475, %v476
    %v478 = vrot.slane %v477, 1
    %v479 = vadd.f32 %v477, %v478
    %v480 = vmax.f32 %v479, 1e-24
    %v481 = vrsqrt.pop %v480
    %v482 = vmul.f32 %v481, %v480
    %v483 = vmul.f32 %v482, %v481
    %v484 = vmul.f32 0.5, %v483
    %v485 = vsub.f32 1.5, %v484
    %v486 = vmul.f32 %v481, %v485
    %vm487 = vweird.f32 %v480
    %vm488 = vweird.f32 %v481
    %vm489 = vmor %vm487, %vm488
    %v490 = vsel %vm489, %v481, %v486
    %vm491 = vcmask 130048
    %v493 = vsel %vm491, %v465, 0
    %v496 = vsel %vm491, %v466, 0
    %v499 = vsel %vm491, %v467, 0
    %v502 = vsel %vm491, %v468, 0
    %504 = vmatpush.msra.mxu0 0.0
    %505 = vmatpush.msra.mxu0 0.0
    %506 = vmatpush.msra.mxu0 0.0
    %507 = vmatpush.msra.mxu0 0.0
    %508 = vmatpush.msra.mxu0 0.0
    %509 = vmatpush.msra.mxu0 0.0
    %510 = vmatpush.msra.mxu0 0.0
    %511 = vmatpush.msra.mxu0 0.0
    %512 = vmatpush.msra.mxu0 0.0
    %513 = vmatpush.msra.mxu0 0.0
    %514 = vmatpush.msra.mxu0 0.0
    %515 = vmatpush.msra.mxu0 0.0
    %516 = vmatpush.msra.mxu0 0.0
    %517 = vmatpush.msra.mxu0 0.0
    %518 = vmatpush.msra.mxu0 %v463
    %519 = vmatpush.msra.mxu0 %v460
    %520 = vmatmul.f32.gmra.mxu0 %v493
    %v521 = vpop.f32.mrf.mxu0
    %v522 = vadd.f32 0.0, %v521
    %523 = vmatmul.f32.gmra.mxu0 %v496
    %v524 = vpop.f32.mrf.mxu0
    %v525 = vadd.f32 0.0, %v524
    %526 = vmatmul.f32.gmra.mxu0 %v499
    %v527 = vpop.f32.mrf.mxu0
    %v528 = vadd.f32 0.0, %v527
    %529 = vmatmul.f32.gmra.mxu0 %v502
    %v530 = vpop.f32.mrf.mxu0
    %v531 = vadd.f32 0.0, %v530
    %532 = vdwg.mxu0
    %v533 = vmul.f32 %v522, %v490
    %v534 = vmul.f32 %v525, %v490
    %v535 = vmul.f32 %v528, %v490
    %v536 = vmul.f32 %v531, %v490
    %v537 = vmax.f32 %v533, -1.0
    %v538 = vmax.f32 %v534, -1.0
    %v539 = vmax.f32 %v535, -1.0
    %v540 = vmax.f32 %v536, -1.0
    %v541 = vmin.f32 %v537, 1.0
    %v542 = vmin.f32 %v538, 1.0
    %v543 = vmin.f32 %v539, 1.0
    %v544 = vmin.f32 %v540, 1.0
    %v545 = vand.u32 2147483647, %v541
    %v546 = vand.u32 2147483647, %v542
    %v547 = vand.u32 2147483647, %v543
    %v548 = vand.u32 2147483647, %v544
    %v549 = vmul.f32 %v545, -0.0187293
    %v550 = vmul.f32 %v546, -0.0187293
    %v551 = vmul.f32 %v547, -0.0187293
    %v552 = vmul.f32 %v548, -0.0187293
    %v553 = vadd.f32 %v549, 0.074261
    %v554 = vadd.f32 %v550, 0.074261
    %v555 = vadd.f32 %v551, 0.074261
    %v556 = vadd.f32 %v552, 0.074261
    %v557 = vmul.f32 %v545, %v553
    %v558 = vmul.f32 %v546, %v554
    %v559 = vmul.f32 %v547, %v555
    %v560 = vmul.f32 %v548, %v556
    %v561 = vadd.f32 %v557, -0.2121144
    %v562 = vadd.f32 %v558, -0.2121144
    %v563 = vadd.f32 %v559, -0.2121144
    %v564 = vadd.f32 %v560, -0.2121144
    %v565 = vmul.f32 %v545, %v561
    %v566 = vmul.f32 %v546, %v562
    %v567 = vmul.f32 %v547, %v563
    %v568 = vmul.f32 %v548, %v564
    %v569 = vadd.f32 %v565, 1.5707288
    %v570 = vadd.f32 %v566, 1.5707288
    %v571 = vadd.f32 %v567, 1.5707288
    %v572 = vadd.f32 %v568, 1.5707288
    %v573 = vsub.f32 1.0, %v545
    %v574 = vsub.f32 1.0, %v546
    %v575 = vsub.f32 1.0, %v547
    %v576 = vsub.f32 1.0, %v548
    %v577 = vmax.f32 %v573, 0.0
    %v578 = vmax.f32 %v574, 0.0
    %v579 = vmax.f32 %v575, 0.0
    %v580 = vmax.f32 %v576, 0.0
    %v581 = vrsqrt.pop %v577
    %v582 = vmul.f32 %v581, %v577
    %v583 = vmul.f32 %v582, %v581
    %v584 = vmul.f32 0.5, %v583
    %v585 = vsub.f32 1.5, %v584
    %v586 = vmul.f32 %v581, %v585
    %v587 = vmul.f32 %v577, %v586
    %vm588 = vcmp.eq.f32.partialorder %v577, inf
    %v589 = vsel %vm588, %v577, %v587
    %vm590 = vcmp.eq.f32.partialorder %v577, 0.0
    %v591 = vand.u32 %v577, 2147483648
    %v592 = vsel %vm590, %v591, %v589
    %v593 = vrsqrt.pop %v578
    %v594 = vmul.f32 %v593, %v578
    %v595 = vmul.f32 %v594, %v593
    %v596 = vmul.f32 0.5, %v595
    %v597 = vsub.f32 1.5, %v596
    %v598 = vmul.f32 %v593, %v597
    %v599 = vmul.f32 %v578, %v598
    %vm600 = vcmp.eq.f32.partialorder %v578, inf
    %v601 = vsel %vm600, %v578, %v599
    %vm602 = vcmp.eq.f32.partialorder %v578, 0.0
    %v603 = vand.u32 %v578, 2147483648
    %v604 = vsel %vm602, %v603, %v601
    %v605 = vrsqrt.pop %v579
    %v606 = vmul.f32 %v605, %v579
    %v607 = vmul.f32 %v606, %v605
    %v608 = vmul.f32 0.5, %v607
    %v609 = vsub.f32 1.5, %v608
    %v610 = vmul.f32 %v605, %v609
    %v611 = vmul.f32 %v579, %v610
    %vm612 = vcmp.eq.f32.partialorder %v579, inf
    %v613 = vsel %vm612, %v579, %v611
    %vm614 = vcmp.eq.f32.partialorder %v579, 0.0
    %v615 = vand.u32 %v579, 2147483648
    %v616 = vsel %vm614, %v615, %v613
    %v617 = vrsqrt.pop %v580
    %v618 = vmul.f32 %v617, %v580
    %v619 = vmul.f32 %v618, %v617
    %v620 = vmul.f32 0.5, %v619
    %v621 = vsub.f32 1.5, %v620
    %v622 = vmul.f32 %v617, %v621
    %v623 = vmul.f32 %v580, %v622
    %vm624 = vcmp.eq.f32.partialorder %v580, inf
    %v625 = vsel %vm624, %v580, %v623
    %vm626 = vcmp.eq.f32.partialorder %v580, 0.0
    %v627 = vand.u32 %v580, 2147483648
    %v628 = vsel %vm626, %v627, %v625
    %v629 = vmul.f32 %v592, %v569
    %v630 = vmul.f32 %v604, %v570
    %v631 = vmul.f32 %v616, %v571
    %v632 = vmul.f32 %v628, %v572
    %vm633 = vcmp.ge.f32.partialorder %v541, 0.0
    %vm634 = vcmp.ge.f32.partialorder %v542, 0.0
    %vm635 = vcmp.ge.f32.partialorder %v543, 0.0
    %vm636 = vcmp.ge.f32.partialorder %v544, 0.0
    %v637 = vsub.f32 3.1415927, %v629
    %v638 = vsub.f32 3.1415927, %v630
    %v639 = vsub.f32 3.1415927, %v631
    %v640 = vsub.f32 3.1415927, %v632
    %v641 = vsel %vm633, %v629, %v637
    %v642 = vsel %vm634, %v630, %v638
    %v643 = vsel %vm635, %v631, %v639
    %v644 = vsel %vm636, %v632, %v640
    %v645 = vmul.f32 %v522, %v522
    %v646 = vmul.f32 %v525, %v525
    %v647 = vmul.f32 %v528, %v528
    %v648 = vmul.f32 %v531, %v531
    %v649 = vsub.f32 %v479, %v645
    %v650 = vsub.f32 %v479, %v646
    %v651 = vsub.f32 %v479, %v647
    %v652 = vsub.f32 %v479, %v648
    %v653 = vmax.f32 %v649, 0.0
    %v654 = vmax.f32 %v650, 0.0
    %v655 = vmax.f32 %v651, 0.0
    %v656 = vmax.f32 %v652, 0.0
    %v657 = vrsqrt.pop %v653
    %v658 = vmul.f32 %v657, %v653
    %v659 = vmul.f32 %v658, %v657
    %v660 = vmul.f32 0.5, %v659
    %v661 = vsub.f32 1.5, %v660
    %v662 = vmul.f32 %v657, %v661
    %v663 = vmul.f32 %v653, %v662
    %vm664 = vcmp.eq.f32.partialorder %v653, inf
    %v665 = vsel %vm664, %v653, %v663
    %vm666 = vcmp.eq.f32.partialorder %v653, 0.0
    %v667 = vand.u32 %v653, 2147483648
    %v668 = vsel %vm666, %v667, %v665
    %v669 = vrsqrt.pop %v654
    %v670 = vmul.f32 %v669, %v654
    %v671 = vmul.f32 %v670, %v669
    %v672 = vmul.f32 0.5, %v671
    %v673 = vsub.f32 1.5, %v672
    %v674 = vmul.f32 %v669, %v673
    %v675 = vmul.f32 %v654, %v674
    %vm676 = vcmp.eq.f32.partialorder %v654, inf
    %v677 = vsel %vm676, %v654, %v675
    %vm678 = vcmp.eq.f32.partialorder %v654, 0.0
    %v679 = vand.u32 %v654, 2147483648
    %v680 = vsel %vm678, %v679, %v677
    %v681 = vrsqrt.pop %v655
    %v682 = vmul.f32 %v681, %v655
    %v683 = vmul.f32 %v682, %v681
    %v684 = vmul.f32 0.5, %v683
    %v685 = vsub.f32 1.5, %v684
    %v686 = vmul.f32 %v681, %v685
    %v687 = vmul.f32 %v655, %v686
    %vm688 = vcmp.eq.f32.partialorder %v655, inf
    %v689 = vsel %vm688, %v655, %v687
    %vm690 = vcmp.eq.f32.partialorder %v655, 0.0
    %v691 = vand.u32 %v655, 2147483648
    %v692 = vsel %vm690, %v691, %v689
    %v693 = vrsqrt.pop %v656
    %v694 = vmul.f32 %v693, %v656
    %v695 = vmul.f32 %v694, %v693
    %v696 = vmul.f32 0.5, %v695
    %v697 = vsub.f32 1.5, %v696
    %v698 = vmul.f32 %v693, %v697
    %v699 = vmul.f32 %v656, %v698
    %vm700 = vcmp.eq.f32.partialorder %v656, inf
    %v701 = vsel %vm700, %v656, %v699
    %vm702 = vcmp.eq.f32.partialorder %v656, 0.0
    %v703 = vand.u32 %v656, 2147483648
    %v704 = vsel %vm702, %v703, %v701
    %v705 = vsub.f32 3.1415927, %v641
    %v706 = vsub.f32 3.1415927, %v642
    %v707 = vsub.f32 3.1415927, %v643
    %v708 = vsub.f32 3.1415927, %v644
    %v709 = vmul.f32 %v705, %v522
    %v710 = vmul.f32 %v706, %v525
    %v711 = vmul.f32 %v707, %v528
    %v712 = vmul.f32 %v708, %v531
    %v713 = vadd.f32 %v668, %v709
    %v714 = vadd.f32 %v680, %v710
    %v715 = vadd.f32 %v692, %v711
    %v716 = vadd.f32 %v704, %v712
    %v717 = vld [vmem:[%s8] sm:$0xff]
    %v718 = vld [vmem:[%s9] sm:$0xff]
    %v719 = vld [vmem:[%s9 + $0x8] sm:$0xff]
    %v721 = vsel %vm337, %v717, 0
    %723 = vmatpush.msra.mxu0 0.0
    %724 = vmatpush.msra.mxu0 0.0
    %725 = vmatpush.msra.mxu0 0.0
    %726 = vmatpush.msra.mxu0 0.0
    %727 = vmatpush.msra.mxu0 0.0
    %728 = vmatpush.msra.mxu0 0.0
    %729 = vmatpush.msra.mxu0 0.0
    %730 = vmatpush.msra.mxu0 0.0
    %731 = vmatpush.msra.mxu0 0.0
    %732 = vmatpush.msra.mxu0 0.0
    %733 = vmatpush.msra.mxu0 0.0
    %734 = vmatpush.msra.mxu0 0.0
    %735 = vmatpush.msra.mxu0 0.0
    %736 = vmatpush.msra.mxu0 0.0
    %737 = vmatpush.msra.mxu0 0.0
    %738 = vmatpush.msra.mxu0 %v59
    %739 = vmatmul.f32.gmra.mxu0 %v721
    %v740 = vpop.f32.mrf.mxu0
    %v741 = vadd.f32 0.0, %v740
    %742 = vdwg.mxu0
    %v743 = vmul.f32 %v741, %v77
    %v744 = vmax.f32 %v743, -1.0
    %v745 = vmin.f32 %v744, 1.0
    %v746 = vand.u32 2147483647, %v745
    %v747 = vmul.f32 %v746, -0.0187293
    %v748 = vadd.f32 %v747, 0.074261
    %v749 = vmul.f32 %v746, %v748
    %v750 = vadd.f32 %v749, -0.2121144
    %v751 = vmul.f32 %v746, %v750
    %v752 = vadd.f32 %v751, 1.5707288
    %v753 = vsub.f32 1.0, %v746
    %v754 = vmax.f32 %v753, 0.0
    %v755 = vrsqrt.pop %v754
    %v756 = vmul.f32 %v755, %v754
    %v757 = vmul.f32 %v756, %v755
    %v758 = vmul.f32 0.5, %v757
    %v759 = vsub.f32 1.5, %v758
    %v760 = vmul.f32 %v755, %v759
    %v761 = vmul.f32 %v754, %v760
    %vm762 = vcmp.eq.f32.partialorder %v754, inf
    %v763 = vsel %vm762, %v754, %v761
    %vm764 = vcmp.eq.f32.partialorder %v754, 0.0
    %v765 = vand.u32 %v754, 2147483648
    %v766 = vsel %vm764, %v765, %v763
    %v767 = vmul.f32 %v766, %v752
    %vm768 = vcmp.ge.f32.partialorder %v745, 0.0
    %v769 = vsub.f32 3.1415927, %v767
    %v770 = vsel %vm768, %v767, %v769
    %v771 = vmul.f32 %v741, %v741
    %v772 = vsub.f32 %v66, %v771
    %v773 = vmax.f32 %v772, 0.0
    %v774 = vrsqrt.pop %v773
    %v775 = vmul.f32 %v774, %v773
    %v776 = vmul.f32 %v775, %v774
    %v777 = vmul.f32 0.5, %v776
    %v778 = vsub.f32 1.5, %v777
    %v779 = vmul.f32 %v774, %v778
    %v780 = vmul.f32 %v773, %v779
    %vm781 = vcmp.eq.f32.partialorder %v773, inf
    %v782 = vsel %vm781, %v773, %v780
    %vm783 = vcmp.eq.f32.partialorder %v773, 0.0
    %v784 = vand.u32 %v773, 2147483648
    %v785 = vsel %vm783, %v784, %v782
    %v786 = vsub.f32 3.1415927, %v770
    %v787 = vmul.f32 %v786, %v741
    %v788 = vadd.f32 %v785, %v787
    %v790 = vsel %vm337, %v718, 0
    %v793 = vsel %vm337, %v719, 0
    %795 = vmatpush.msra.mxu0 0.0
    %796 = vmatpush.msra.mxu0 0.0
    %797 = vmatpush.msra.mxu0 0.0
    %798 = vmatpush.msra.mxu0 0.0
    %799 = vmatpush.msra.mxu0 0.0
    %800 = vmatpush.msra.mxu0 0.0
    %801 = vmatpush.msra.mxu0 0.0
    %802 = vmatpush.msra.mxu0 0.0
    %803 = vmatpush.msra.mxu0 0.0
    %804 = vmatpush.msra.mxu0 0.0
    %805 = vmatpush.msra.mxu0 0.0
    %806 = vmatpush.msra.mxu0 0.0
    %807 = vmatpush.msra.mxu0 0.0
    %808 = vmatpush.msra.mxu0 0.0
    %809 = vmatpush.msra.mxu0 0.0
    %810 = vmatpush.msra.mxu0 %v788
    %811 = vmatmul.f32.gmra.mxu0 %v790
    %v812 = vpop.f32.mrf.mxu0
    %v813 = vadd.f32 0.0, %v812
    %814 = vmatmul.f32.gmra.mxu0 %v793
    %v815 = vpop.f32.mrf.mxu0
    %v816 = vadd.f32 0.0, %v815
    %817 = vdwg.mxu0
    %v819 = vsel %vm108, %v469, 0
    %v822 = vsel %vm108, %v470, 0
    %824 = vmatpush.msra.mxu0 0.0
    %825 = vmatpush.msra.mxu0 0.0
    %826 = vmatpush.msra.mxu0 0.0
    %827 = vmatpush.msra.mxu0 0.0
    %828 = vmatpush.msra.mxu0 0.0
    %829 = vmatpush.msra.mxu0 0.0
    %830 = vmatpush.msra.mxu0 0.0
    %831 = vmatpush.msra.mxu0 0.0
    %832 = vmatpush.msra.mxu0 0.0
    %833 = vmatpush.msra.mxu0 0.0
    %834 = vmatpush.msra.mxu0 0.0
    %835 = vmatpush.msra.mxu0 0.0
    %836 = vmatpush.msra.mxu0 %v716
    %837 = vmatpush.msra.mxu0 %v715
    %838 = vmatpush.msra.mxu0 %v714
    %839 = vmatpush.msra.mxu0 %v713
    %840 = vmatmul.f32.gmra.mxu0 %v819
    %v841 = vpop.f32.mrf.mxu0
    %v842 = vadd.f32 %v813, %v841
    %843 = vmatmul.f32.gmra.mxu0 %v822
    %v844 = vpop.f32.mrf.mxu0
    %v845 = vadd.f32 %v816, %v844
    %846 = vdwg.mxu0
    %v847 = vld [vmem:[%s10] sm:$0xff]
    %v848 = vld [vmem:[%s10 + $0x8] sm:$0xff]
    %v849 = vld [vmem:[%s10 + $0x10] sm:$0xff]
    %v850 = vld [vmem:[%s10 + $0x18] sm:$0xff]
    %v851 = vld [vmem:[%s11] sm:$0xff]
    %v852 = vld [vmem:[%s11 + $0x8] sm:$0xff]
    %v853 = vld [vmem:[%s11 + $0x10] sm:$0xff]
    %v854 = vld [vmem:[%s11 + $0x18] sm:$0xff]
    %v855 = vld [vmem:[%s11 + $0x20] sm:$0xff]
    %v856 = vmul.f32 %v842, %v842
    %v857 = vmul.f32 %v845, %v845
    %v858 = vadd.f32 %v856, %v857
    %v859 = vrot.slane %v858, 4
    %v860 = vadd.f32 %v858, %v859
    %v861 = vrot.slane %v860, 2
    %v862 = vadd.f32 %v860, %v861
    %v863 = vrot.slane %v862, 1
    %v864 = vadd.f32 %v862, %v863
    %v865 = vmax.f32 %v864, 1e-24
    %v866 = vrsqrt.pop %v865
    %v867 = vmul.f32 %v866, %v865
    %v868 = vmul.f32 %v867, %v866
    %v869 = vmul.f32 0.5, %v868
    %v870 = vsub.f32 1.5, %v869
    %v871 = vmul.f32 %v866, %v870
    %vm872 = vweird.f32 %v865
    %vm873 = vweird.f32 %v866
    %vm874 = vmor %vm872, %vm873
    %v875 = vsel %vm874, %v866, %v871
    %v877 = vsel %vm491, %v847, 0
    %v880 = vsel %vm491, %v848, 0
    %v883 = vsel %vm491, %v849, 0
    %v886 = vsel %vm491, %v850, 0
    %888 = vmatpush.msra.mxu0 0.0
    %889 = vmatpush.msra.mxu0 0.0
    %890 = vmatpush.msra.mxu0 0.0
    %891 = vmatpush.msra.mxu0 0.0
    %892 = vmatpush.msra.mxu0 0.0
    %893 = vmatpush.msra.mxu0 0.0
    %894 = vmatpush.msra.mxu0 0.0
    %895 = vmatpush.msra.mxu0 0.0
    %896 = vmatpush.msra.mxu0 0.0
    %897 = vmatpush.msra.mxu0 0.0
    %898 = vmatpush.msra.mxu0 0.0
    %899 = vmatpush.msra.mxu0 0.0
    %900 = vmatpush.msra.mxu0 0.0
    %901 = vmatpush.msra.mxu0 0.0
    %902 = vmatpush.msra.mxu0 %v845
    %903 = vmatpush.msra.mxu0 %v842
    %904 = vmatmul.f32.gmra.mxu0 %v877
    %v905 = vpop.f32.mrf.mxu0
    %v906 = vadd.f32 0.0, %v905
    %907 = vmatmul.f32.gmra.mxu0 %v880
    %v908 = vpop.f32.mrf.mxu0
    %v909 = vadd.f32 0.0, %v908
    %910 = vmatmul.f32.gmra.mxu0 %v883
    %v911 = vpop.f32.mrf.mxu0
    %v912 = vadd.f32 0.0, %v911
    %913 = vmatmul.f32.gmra.mxu0 %v886
    %v914 = vpop.f32.mrf.mxu0
    %v915 = vadd.f32 0.0, %v914
    %916 = vdwg.mxu0
    %v917 = vmul.f32 %v906, %v875
    %v918 = vmul.f32 %v909, %v875
    %v919 = vmul.f32 %v912, %v875
    %v920 = vmul.f32 %v915, %v875
    %v921 = vmax.f32 %v917, -1.0
    %v922 = vmax.f32 %v918, -1.0
    %v923 = vmax.f32 %v919, -1.0
    %v924 = vmax.f32 %v920, -1.0
    %v925 = vmin.f32 %v921, 1.0
    %v926 = vmin.f32 %v922, 1.0
    %v927 = vmin.f32 %v923, 1.0
    %v928 = vmin.f32 %v924, 1.0
    %v929 = vand.u32 2147483647, %v925
    %v930 = vand.u32 2147483647, %v926
    %v931 = vand.u32 2147483647, %v927
    %v932 = vand.u32 2147483647, %v928
    %v933 = vmul.f32 %v929, -0.0187293
    %v934 = vmul.f32 %v930, -0.0187293
    %v935 = vmul.f32 %v931, -0.0187293
    %v936 = vmul.f32 %v932, -0.0187293
    %v937 = vadd.f32 %v933, 0.074261
    %v938 = vadd.f32 %v934, 0.074261
    %v939 = vadd.f32 %v935, 0.074261
    %v940 = vadd.f32 %v936, 0.074261
    %v941 = vmul.f32 %v929, %v937
    %v942 = vmul.f32 %v930, %v938
    %v943 = vmul.f32 %v931, %v939
    %v944 = vmul.f32 %v932, %v940
    %v945 = vadd.f32 %v941, -0.2121144
    %v946 = vadd.f32 %v942, -0.2121144
    %v947 = vadd.f32 %v943, -0.2121144
    %v948 = vadd.f32 %v944, -0.2121144
    %v949 = vmul.f32 %v929, %v945
    %v950 = vmul.f32 %v930, %v946
    %v951 = vmul.f32 %v931, %v947
    %v952 = vmul.f32 %v932, %v948
    %v953 = vadd.f32 %v949, 1.5707288
    %v954 = vadd.f32 %v950, 1.5707288
    %v955 = vadd.f32 %v951, 1.5707288
    %v956 = vadd.f32 %v952, 1.5707288
    %v957 = vsub.f32 1.0, %v929
    %v958 = vsub.f32 1.0, %v930
    %v959 = vsub.f32 1.0, %v931
    %v960 = vsub.f32 1.0, %v932
    %v961 = vmax.f32 %v957, 0.0
    %v962 = vmax.f32 %v958, 0.0
    %v963 = vmax.f32 %v959, 0.0
    %v964 = vmax.f32 %v960, 0.0
    %v965 = vrsqrt.pop %v961
    %v966 = vmul.f32 %v965, %v961
    %v967 = vmul.f32 %v966, %v965
    %v968 = vmul.f32 0.5, %v967
    %v969 = vsub.f32 1.5, %v968
    %v970 = vmul.f32 %v965, %v969
    %v971 = vmul.f32 %v961, %v970
    %vm972 = vcmp.eq.f32.partialorder %v961, inf
    %v973 = vsel %vm972, %v961, %v971
    %vm974 = vcmp.eq.f32.partialorder %v961, 0.0
    %v975 = vand.u32 %v961, 2147483648
    %v976 = vsel %vm974, %v975, %v973
    %v977 = vrsqrt.pop %v962
    %v978 = vmul.f32 %v977, %v962
    %v979 = vmul.f32 %v978, %v977
    %v980 = vmul.f32 0.5, %v979
    %v981 = vsub.f32 1.5, %v980
    %v982 = vmul.f32 %v977, %v981
    %v983 = vmul.f32 %v962, %v982
    %vm984 = vcmp.eq.f32.partialorder %v962, inf
    %v985 = vsel %vm984, %v962, %v983
    %vm986 = vcmp.eq.f32.partialorder %v962, 0.0
    %v987 = vand.u32 %v962, 2147483648
    %v988 = vsel %vm986, %v987, %v985
    %v989 = vrsqrt.pop %v963
    %v990 = vmul.f32 %v989, %v963
    %v991 = vmul.f32 %v990, %v989
    %v992 = vmul.f32 0.5, %v991
    %v993 = vsub.f32 1.5, %v992
    %v994 = vmul.f32 %v989, %v993
    %v995 = vmul.f32 %v963, %v994
    %vm996 = vcmp.eq.f32.partialorder %v963, inf
    %v997 = vsel %vm996, %v963, %v995
    %vm998 = vcmp.eq.f32.partialorder %v963, 0.0
    %v999 = vand.u32 %v963, 2147483648
    %v1000 = vsel %vm998, %v999, %v997
    %v1001 = vrsqrt.pop %v964
    %v1002 = vmul.f32 %v1001, %v964
    %v1003 = vmul.f32 %v1002, %v1001
    %v1004 = vmul.f32 0.5, %v1003
    %v1005 = vsub.f32 1.5, %v1004
    %v1006 = vmul.f32 %v1001, %v1005
    %v1007 = vmul.f32 %v964, %v1006
    %vm1008 = vcmp.eq.f32.partialorder %v964, inf
    %v1009 = vsel %vm1008, %v964, %v1007
    %vm1010 = vcmp.eq.f32.partialorder %v964, 0.0
    %v1011 = vand.u32 %v964, 2147483648
    %v1012 = vsel %vm1010, %v1011, %v1009
    %v1013 = vmul.f32 %v976, %v953
    %v1014 = vmul.f32 %v988, %v954
    %v1015 = vmul.f32 %v1000, %v955
    %v1016 = vmul.f32 %v1012, %v956
    %vm1017 = vcmp.ge.f32.partialorder %v925, 0.0
    %vm1018 = vcmp.ge.f32.partialorder %v926, 0.0
    %vm1019 = vcmp.ge.f32.partialorder %v927, 0.0
    %vm1020 = vcmp.ge.f32.partialorder %v928, 0.0
    %v1021 = vsub.f32 3.1415927, %v1013
    %v1022 = vsub.f32 3.1415927, %v1014
    %v1023 = vsub.f32 3.1415927, %v1015
    %v1024 = vsub.f32 3.1415927, %v1016
    %v1025 = vsel %vm1017, %v1013, %v1021
    %v1026 = vsel %vm1018, %v1014, %v1022
    %v1027 = vsel %vm1019, %v1015, %v1023
    %v1028 = vsel %vm1020, %v1016, %v1024
    %v1029 = vmul.f32 %v906, %v906
    %v1030 = vmul.f32 %v909, %v909
    %v1031 = vmul.f32 %v912, %v912
    %v1032 = vmul.f32 %v915, %v915
    %v1033 = vsub.f32 %v864, %v1029
    %v1034 = vsub.f32 %v864, %v1030
    %v1035 = vsub.f32 %v864, %v1031
    %v1036 = vsub.f32 %v864, %v1032
    %v1037 = vmax.f32 %v1033, 0.0
    %v1038 = vmax.f32 %v1034, 0.0
    %v1039 = vmax.f32 %v1035, 0.0
    %v1040 = vmax.f32 %v1036, 0.0
    %v1041 = vrsqrt.pop %v1037
    %v1042 = vmul.f32 %v1041, %v1037
    %v1043 = vmul.f32 %v1042, %v1041
    %v1044 = vmul.f32 0.5, %v1043
    %v1045 = vsub.f32 1.5, %v1044
    %v1046 = vmul.f32 %v1041, %v1045
    %v1047 = vmul.f32 %v1037, %v1046
    %vm1048 = vcmp.eq.f32.partialorder %v1037, inf
    %v1049 = vsel %vm1048, %v1037, %v1047
    %vm1050 = vcmp.eq.f32.partialorder %v1037, 0.0
    %v1051 = vand.u32 %v1037, 2147483648
    %v1052 = vsel %vm1050, %v1051, %v1049
    %v1053 = vrsqrt.pop %v1038
    %v1054 = vmul.f32 %v1053, %v1038
    %v1055 = vmul.f32 %v1054, %v1053
    %v1056 = vmul.f32 0.5, %v1055
    %v1057 = vsub.f32 1.5, %v1056
    %v1058 = vmul.f32 %v1053, %v1057
    %v1059 = vmul.f32 %v1038, %v1058
    %vm1060 = vcmp.eq.f32.partialorder %v1038, inf
    %v1061 = vsel %vm1060, %v1038, %v1059
    %vm1062 = vcmp.eq.f32.partialorder %v1038, 0.0
    %v1063 = vand.u32 %v1038, 2147483648
    %v1064 = vsel %vm1062, %v1063, %v1061
    %v1065 = vrsqrt.pop %v1039
    %v1066 = vmul.f32 %v1065, %v1039
    %v1067 = vmul.f32 %v1066, %v1065
    %v1068 = vmul.f32 0.5, %v1067
    %v1069 = vsub.f32 1.5, %v1068
    %v1070 = vmul.f32 %v1065, %v1069
    %v1071 = vmul.f32 %v1039, %v1070
    %vm1072 = vcmp.eq.f32.partialorder %v1039, inf
    %v1073 = vsel %vm1072, %v1039, %v1071
    %vm1074 = vcmp.eq.f32.partialorder %v1039, 0.0
    %v1075 = vand.u32 %v1039, 2147483648
    %v1076 = vsel %vm1074, %v1075, %v1073
    %v1077 = vrsqrt.pop %v1040
    %v1078 = vmul.f32 %v1077, %v1040
    %v1079 = vmul.f32 %v1078, %v1077
    %v1080 = vmul.f32 0.5, %v1079
    %v1081 = vsub.f32 1.5, %v1080
    %v1082 = vmul.f32 %v1077, %v1081
    %v1083 = vmul.f32 %v1040, %v1082
    %vm1084 = vcmp.eq.f32.partialorder %v1040, inf
    %v1085 = vsel %vm1084, %v1040, %v1083
    %vm1086 = vcmp.eq.f32.partialorder %v1040, 0.0
    %v1087 = vand.u32 %v1040, 2147483648
    %v1088 = vsel %vm1086, %v1087, %v1085
    %v1089 = vsub.f32 3.1415927, %v1025
    %v1090 = vsub.f32 3.1415927, %v1026
    %v1091 = vsub.f32 3.1415927, %v1027
    %v1092 = vsub.f32 3.1415927, %v1028
    %v1093 = vmul.f32 %v1089, %v906
    %v1094 = vmul.f32 %v1090, %v909
    %v1095 = vmul.f32 %v1091, %v912
    %v1096 = vmul.f32 %v1092, %v915
    %v1097 = vadd.f32 %v1052, %v1093
    %v1098 = vadd.f32 %v1064, %v1094
    %v1099 = vadd.f32 %v1076, %v1095
    %v1100 = vadd.f32 %v1088, %v1096
    %v1102 = vsel %vm108, %v851, 0
    %v1105 = vsel %vm108, %v852, 0
    %v1108 = vsel %vm108, %v853, 0
    %v1111 = vsel %vm108, %v854, 0
    %v1114 = vsel %vm108, %v855, 0
    %1116 = vmatpush.msra.mxu0 0.0
    %1117 = vmatpush.msra.mxu0 0.0
    %1118 = vmatpush.msra.mxu0 0.0
    %1119 = vmatpush.msra.mxu0 0.0
    %1120 = vmatpush.msra.mxu0 0.0
    %1121 = vmatpush.msra.mxu0 0.0
    %1122 = vmatpush.msra.mxu0 0.0
    %1123 = vmatpush.msra.mxu0 0.0
    %1124 = vmatpush.msra.mxu0 0.0
    %1125 = vmatpush.msra.mxu0 0.0
    %1126 = vmatpush.msra.mxu0 0.0
    %1127 = vmatpush.msra.mxu0 0.0
    %1128 = vmatpush.msra.mxu0 %v1100
    %1129 = vmatpush.msra.mxu0 %v1099
    %1130 = vmatpush.msra.mxu0 %v1098
    %1131 = vmatpush.msra.mxu0 %v1097
    %1132 = vmatmul.f32.gmra.mxu0 %v1102
    %v1133 = vpop.f32.mrf.mxu0
    %v1134 = vadd.f32 0.0, %v1133
    %1135 = vmatmul.f32.gmra.mxu0 %v1105
    %v1136 = vpop.f32.mrf.mxu0
    %v1137 = vadd.f32 0.0, %v1136
    %1138 = vmatmul.f32.gmra.mxu0 %v1108
    %v1139 = vpop.f32.mrf.mxu0
    %v1140 = vadd.f32 0.0, %v1139
    %1141 = vmatmul.f32.gmra.mxu0 %v1111
    %v1142 = vpop.f32.mrf.mxu0
    %v1143 = vadd.f32 0.0, %v1142
    %1144 = vmatmul.f32.gmra.mxu0 %v1114
    %v1145 = vpop.f32.mrf.mxu0
    %v1146 = vadd.f32 0.0, %v1145
    %1147 = vdwg.mxu0
    %v1148 = vmul.f32 %v1134, %v1097
    %v1149 = vmul.f32 %v1137, %v1098
    %v1150 = vmul.f32 %v1140, %v1099
    %v1151 = vmul.f32 %v1143, %v1100
    %v1152 = vadd.f32 %v1148, %v1149
    %v1153 = vadd.f32 %v1152, %v1150
    %v1154 = vadd.f32 %v1153, %v1151
    %v1155 = vrot.slane %v1154, 4
    %v1156 = vadd.f32 %v1154, %v1155
    %v1157 = vrot.slane %v1156, 2
    %v1158 = vadd.f32 %v1156, %v1157
    %v1159 = vrot.slane %v1158, 1
    %v1160 = vadd.f32 %v1158, %v1159
    %v1161 = vadd.f32 %v864, %v1160
    %v1162 = vmax.f32 %v1161, 1e-08
    %1163 = vst [vmem:[%s12] sm:$0xff] %v1146
    %1164 = vst [vmem:[%s12 + $0x8] sm:$0xff] %v1162
    // Predicated region
    $region54: #{_forward_impl.1} parent=1 // pred_check
      _
    $region55: #{_forward_impl.1} parent=1 // pred_check_branch
      %1166 = sbr.rel (0) target = $region57
    $region56: #{_forward_impl.1} parent=1 // pred_region
      _
    $region57: #{_forward_impl.1} parent=1 // pred_fallthru
      _
    // Predicated region
    $region58: #{_forward_impl.1} parent=1 // pred_check
      _
    $region59: #{_forward_impl.1} parent=1 // pred_check_branch
      %1168 = sbr.rel (0) target = $region61
    $region60: #{_forward_impl.1} parent=1 // pred_region
      _
    $region61: #{_forward_impl.1} parent=1 // pred_fallthru
      _
    %1169 = vsyncpa [#allocation3], 1

</llo_original>
